<compile_context>
chip_gen: v7x
topology: tpu7x:2x2x1
jax: 0.10.0
libtpu: 0.0.40
codegen_flags: <defaults>
</compile_context>

<pallas_src>
import functools
import math

import jax
import jax.numpy as jnp
from jax.experimental import pallas as pl
from jax.experimental.pallas import tpu as pltpu

VOCAB = 128
EMBED = 32
HIDDEN = 32
EPS = 1e-10
TEMPERATURE = 1.0   # reference multiplies gumbel_t by temperature (==1.0 here)

_VMEM = pl.BlockSpec(memory_space=pltpu.MemorySpace.VMEM)


# -----------------------------------------------------------------------------
# Fused kernel: embedding-gather + input-proj + LSTM recurrence + pad_packed
# zero-mask + output projection + gumbel-softmax + argmax.
# -----------------------------------------------------------------------------
def _decoder_kernel(caps_ref, mask_ref, ewih_ref, whh_ref, b_ref, wout_ref,
                    bout_ref, u_ref, pred_ref, idx_ref, xproj_ref, hseq_ref,
                    *, batch, hidden, steps, pretrain):
    # caps_ref : [T*Bp, 1]  int32  time-major flattened token ids
    # mask_ref : [T*Bp, 1]  f32    1.0 where t < length[b], else 0.0
    # ewih_ref : [V, 4H]    f32    embed @ W_ih^T   (g-block columns pre-scaled x2)
    # whh_ref  : [H, 4H]    f32    W_hh^T           (g-block columns pre-scaled x2)
    # b_ref    : [1, 4H]    f32    b_ih + b_hh      (g-block columns pre-scaled x2)
    # wout_ref : [H, V], bout_ref: [1, V]
    # u_ref    : [T*Bp, V]  f32    uniform(0,1) noise for Gumbel
    # pred_ref : [T*Bp, V]  f32 ; idx_ref: [T*Bp, 1] int32
    # xproj_ref: [T*Bp, 4H] f32 scratch ; hseq_ref: [T*Bp, H] f32 scratch
    TB, V = u_ref.shape
    H = hidden
    B = batch

    # ---- embedding gather (one-hot matmul) fused with hoisted input projection
    lane = jax.lax.broadcasted_iota(jnp.int32, (TB, V), 1)
    onehot = (caps_ref[...] == lane).astype(jnp.float32)          # [TB, V]
    xproj_ref[...] = (
        jnp.dot(onehot, ewih_ref[...], preferred_element_type=jnp.float32)
        + b_ref[...]
    )                                                             # [TB, 4H]

    # g-gate (cell) column mask for the tanh-via-sigmoid trick.
    gcol = jax.lax.broadcasted_iota(jnp.int32, (B, 4 * H), 1)
    is_g = (gcol >= 2 * H) & (gcol < 3 * H)

    whh = whh_ref[...]                                            # [H, 4H]
    h = jnp.zeros((B, H), jnp.float32)
    c = jnp.zeros((B, H), jnp.float32)

    # Serial recurrence: statically unrolled (steps is small & trace-time known).
    for t in range(steps):
        gates = xproj_ref[pl.ds(t * B, B), :] + jnp.dot(
            h, whh, preferred_element_type=jnp.float32)           # [B, 4H]
        s = jax.nn.sigmoid(gates)                 # one EUP pass over the full vreg
        act = jnp.where(is_g, 2.0 * s - 1.0, s)   # tanh(x) = 2*sigmoid(2x) - 1
        i_g = act[:, 0 * H:1 * H]                 # PyTorch gate order: i, f, g, o
        f_g = act[:, 1 * H:2 * H]
        g_g = act[:, 2 * H:3 * H]
        o_g = act[:, 3 * H:4 * H]
        c = f_g * c + i_g * g_g
        h = o_g * jnp.tanh(c)
        hseq_ref[pl.ds(t * B, B), :] = h

    # ---- pad_packed_sequence zero mask + output projection -------------------
    h_all = hseq_ref[...] * mask_ref[...]                         # [TB, H]
    logits = (
        jnp.dot(h_all, wout_ref[...], preferred_element_type=jnp.float32)
        + bout_ref[...]
    )                                                             # [TB, V]

    if pretrain:
        z = logits
        p = logits
        zmax = jnp.max(z, axis=-1, keepdims=True)
    else:
        gum = -jnp.log(-jnp.log(u_ref[...] + EPS) + EPS)          # Gumbel(0,1)
        z = (logits + gum) * TEMPERATURE
        zmax = jnp.max(z, axis=-1, keepdims=True)
        e = jnp.exp(z - zmax)
        p = e * pl.reciprocal(jnp.sum(e, axis=-1, keepdims=True), approx=True)
    pred_ref[...] = p

    # argmax from pre-softmax scores (softmax is monotonic; ties -> first index).
    col = jax.lax.broadcasted_iota(jnp.int32, z.shape, 1)
    idx = jnp.min(jnp.where(z >= zmax, col, V), axis=-1, keepdims=True)
    idx_ref[...] = idx.astype(jnp.int32)


def run_decoder(caps_tm, mask_tm, ewih, whh_t, b_lstm, wout_t, b_out, u,
                *, batch, steps, pretrain):
    TB = caps_tm.shape[0]
    V = ewih.shape[0]
    H = whh_t.shape[0]
    kernel = functools.partial(
        _decoder_kernel, batch=batch, hidden=H, steps=steps, pretrain=pretrain)
    return pl.pallas_call(
        kernel,
        out_shape=(
            jax.ShapeDtypeStruct((TB, V), jnp.float32),
            jax.ShapeDtypeStruct((TB, 1), jnp.int32),
        ),
        in_specs=[_VMEM] * 8,
        out_specs=(_VMEM, _VMEM),
        scratch_shapes=[
            pltpu.VMEM((TB, 4 * H), jnp.float32),   # hoisted x @ W_ih^T + b
            pltpu.VMEM((TB, H), jnp.float32),       # per-step hidden states
        ],
    )(caps_tm, mask_tm, ewih, whh_t, b_lstm, wout_t, b_out, u)


# -----------------------------------------------------------------------------
# Parameters (deterministic, synthetic) pre-fused for the kernel.
# -----------------------------------------------------------------------------
def init_params(key):
    ks = jax.random.split(key, 7)
    embed = jax.random.normal(ks[0], (VOCAB, EMBED), jnp.float32)
    embed = embed.at[1].set(0.0)                    # padding_idx = 1
    s = 1.0 / math.sqrt(HIDDEN)
    w_ih = jax.random.uniform(ks[1], (4 * HIDDEN, EMBED), jnp.float32, -s, s)
    w_hh = jax.random.uniform(ks[2], (4 * HIDDEN, HIDDEN), jnp.float32, -s, s)
    b_ih = jax.random.uniform(ks[3], (4 * HIDDEN,), jnp.float32, -s, s)
    b_hh = jax.random.uniform(ks[4], (4 * HIDDEN,), jnp.float32, -s, s)
    w_out = jax.random.uniform(ks[5], (VOCAB, HIDDEN), jnp.float32, -s, s)
    b_out = jax.random.uniform(ks[6], (VOCAB,), jnp.float32, -s, s)

    # Fold the embedding table into the input projection (gather == one-hot matmul,
    # and the LSTM only ever sees x @ W_ih^T).
    embed_wih = embed @ w_ih.T                      # [V, 4H]
    w_hh_t = w_hh.T                                 # [H, 4H]
    b_lstm = (b_ih + b_hh)[None, :]                 # [1, 4H]

    # tanh-via-sigmoid: pre-scale the g (cell) gate block by 2 so the kernel can
    # compute tanh(x) = 2*sigmoid(2x) - 1 with a single sigmoid over all gates.
    gsl = slice(2 * HIDDEN, 3 * HIDDEN)
    embed_wih = embed_wih.at[:, gsl].multiply(2.0)
    w_hh_t = w_hh_t.at[:, gsl].multiply(2.0)
    b_lstm = b_lstm.at[:, gsl].multiply(2.0)

    return {
        "embed_wih": embed_wih,                     # [V, 4H]
        "w_hh_t": w_hh_t,                           # [H, 4H]
        "b_lstm": b_lstm,                           # [1, 4H]
        "w_out_t": w_out.T,                         # [H, V]
        "b_out": b_out[None, :],                    # [1, V]
    }


# -----------------------------------------------------------------------------
# Forward wrapper (matches Decoder.forward for the LSTM / non-conditional path).
# -----------------------------------------------------------------------------
def decoder_forward(params, image_features, caps, lengths, key, pretrain=False):
    del image_features  # conditional_gan=False: unused in this branch
    caps = jnp.asarray(caps, jnp.int32)
    B, T = caps.shape
    lengths_eff = jnp.asarray(lengths, jnp.int32) - 1      # `lengths -= 1`

    # Pad batch to a multiple of 8 sublanes (padded rows get length 0 -> masked).
    B_pad = ((B + 7) // 8) * 8
    pad = B_pad - B
    caps_p = jnp.pad(caps, ((0, pad), (0, 0)), constant_values=1)
    lens_p = jnp.pad(lengths_eff, (0, pad), constant_values=0)

    # Time-major flatten: row r = t*B_pad + b.
    caps_tm = jnp.transpose(caps_p, (1, 0)).reshape(T * B_pad, 1)
    mask_tm = (jnp.arange(T)[:, None] < lens_p[None, :]).astype(
        jnp.float32).reshape(T * B_pad, 1)

    # Gumbel uniform noise (torch used in-place uniform_; different RNG stream).
    u = jax.random.uniform(key, (T * B_pad, VOCAB), dtype=jnp.float32)

    pred_tm, idx_tm = run_decoder(
        caps_tm, mask_tm, params["embed_wih"], params["w_hh_t"],
        params["b_lstm"], params["w_out_t"], params["b_out"], u,
        batch=B_pad, steps=T, pretrain=pretrain)

    # Back to batch-major; truncate to max(lengths) like pad_packed_sequence.
    # NOTE: requires concrete `lengths` (same as the PyTorch pack/pad path).
    t_out = int(jnp.max(lengths_eff))
    pred = pred_tm.reshape(T, B_pad, VOCAB).transpose(1, 0, 2)[:B, :t_out]
    pred_index = idx_tm.reshape(T, B_pad).transpose(1, 0)[:B, :t_out]
    return pred, pred_index


if __name__ == "__main__":
    root = jax.random.PRNGKey(0)
    k_param, k_caps, k_img, k_gumbel = jax.random.split(root, 4)

    params = init_params(k_param)

    B, T = 4, 9
    caps = jax.random.randint(k_caps, (B, T), 2, VOCAB, dtype=jnp.int32)
    lengths = jnp.array([9, 8, 7, 6], dtype=jnp.int32)   # sorted desc (pack req.)
    image_features = jax.random.normal(k_img, (B, 64), jnp.float32)  # unused

    pred, pred_index = decoder_forward(
        params, image_features, caps, lengths, k_gumbel, pretrain=False)
    jax.block_until_ready((pred, pred_index))

    t_out = int(jnp.max(lengths)) - 1
    assert pred.shape == (B, t_out, VOCAB)
    assert pred_index.shape == (B, t_out)
    # softmax rows sum to ~1 (approx reciprocal -> loose tolerance)
    assert bool(jnp.all(jnp.abs(jnp.sum(pred, axis=-1) - 1.0) < 1e-2))
    assert bool(jnp.all((pred_index >= 0) & (pred_index < VOCAB)))
    print("KERNEL_OK")
</pallas_src>

<mosaic_0001>
module attributes {stable_mosaic.version = 11 : i64} {
  func.func @_decoder_kernel(%arg0: memref<72x1xi32, #tpu.memory_space<vmem>>, %arg1: memref<72x1xf32, #tpu.memory_space<vmem>>, %arg2: memref<128x128xf32, #tpu.memory_space<vmem>>, %arg3: memref<32x128xf32, #tpu.memory_space<vmem>>, %arg4: memref<1x128xf32, #tpu.memory_space<vmem>>, %arg5: memref<32x128xf32, #tpu.memory_space<vmem>>, %arg6: memref<1x128xf32, #tpu.memory_space<vmem>>, %arg7: memref<72x128xf32, #tpu.memory_space<vmem>>, %arg8: memref<72x128xf32, #tpu.memory_space<vmem>>, %arg9: memref<72x1xi32, #tpu.memory_space<vmem>>, %arg10: memref<72x128xf32, #tpu.memory_space<vmem>>, %arg11: memref<72x32xf32, #tpu.memory_space<vmem>>) attributes {dimension_semantics = [], scalar_prefetch = 0 : i64, scratch_operands = 2 : i64, tpu.core_type = #tpu.core_type<tc>} {
    %0 = tpu.iota {dimensions = array<i32: 1>} : vector<72x128xi32>
    %c0 = arith.constant 0 : index
    %c0_0 = arith.constant 0 : index
    %1 = vector.load %arg0[%c0, %c0_0] : memref<72x1xi32, #tpu.memory_space<vmem>>, vector<72x1xi32>
    %2 = vector.broadcast %1 : vector<72x1xi32> to vector<72x128xi32>
    %3 = arith.cmpi eq, %2, %0 : vector<72x128xi32>
    %4 = arith.extui %3 : vector<72x128xi1> to vector<72x128xi32>
    %5 = arith.sitofp %4 : vector<72x128xi32> to vector<72x128xf32>
    %c0_1 = arith.constant 0 : index
    %c0_2 = arith.constant 0 : index
    %6 = vector.load %arg2[%c0_1, %c0_2] : memref<128x128xf32, #tpu.memory_space<vmem>>, vector<128x128xf32>
    %cst = arith.constant dense<0.000000e+00> : vector<72x128xf32>
    %7 = tpu.matmul %5, %6, %cst {dimension_numbers = #tpu.dot_dimension_numbers<[1], [0], [0], [1], [0, 0, 1, 1], [], []>} : vector<72x128xf32>, vector<128x128xf32>, vector<72x128xf32> -> vector<72x128xf32>
    %c0_3 = arith.constant 0 : index
    %c0_4 = arith.constant 0 : index
    %8 = vector.load %arg4[%c0_3, %c0_4] : memref<1x128xf32, #tpu.memory_space<vmem>>, vector<1x128xf32>
    %9 = vector.broadcast %8 : vector<1x128xf32> to vector<72x128xf32>
    %10 = arith.addf %7, %9 : vector<72x128xf32>
    %c0_5 = arith.constant 0 : index
    %c0_6 = arith.constant 0 : index
    %11 = vector.load %arg10[%c0_5, %c0_6] : memref<72x128xf32, #tpu.memory_space<vmem>>, vector<72x128xf32>
    tpu.vector_store %arg10[%c0_5, %c0_6], %10 {strides = array<i32>} : memref<72x128xf32, #tpu.memory_space<vmem>>, vector<72x128xf32>,
    %12 = tpu.iota {dimensions = array<i32: 1>} : vector<8x128xi32>
    %c64_i32 = arith.constant 64 : i32
    %13 = vector.broadcast %c64_i32 : i32 to vector<8x128xi32>
    %14 = arith.cmpi sge, %12, %13 : vector<8x128xi32>
    %c96_i32 = arith.constant 96 : i32
    %15 = vector.broadcast %c96_i32 : i32 to vector<8x128xi32>
    %16 = arith.cmpi slt, %12, %15 : vector<8x128xi32>
    %17 = arith.andi %14, %16 : vector<8x128xi1>
    %c0_7 = arith.constant 0 : index
    %c0_8 = arith.constant 0 : index
    %18 = vector.load %arg3[%c0_7, %c0_8] : memref<32x128xf32, #tpu.memory_space<vmem>>, vector<32x128xf32>
    %cst_9 = arith.constant 0.000000e+00 : f32
    %19 = vector.broadcast %cst_9 : f32 to vector<8x32xf32>
    %cst_10 = arith.constant 0.000000e+00 : f32
    %20 = vector.broadcast %cst_10 : f32 to vector<8x32xf32>
    %c0_11 = arith.constant 0 : index
    %c0_12 = arith.constant 0 : index
    %21 = vector.load %arg10[%c0_11, %c0_12] : memref<72x128xf32, #tpu.memory_space<vmem>>, vector<8x128xf32>
    %cst_13 = arith.constant dense<0.000000e+00> : vector<8x128xf32>
    %22 = tpu.matmul %19, %18, %cst_13 {dimension_numbers = #tpu.dot_dimension_numbers<[1], [0], [0], [1], [0, 0, 1, 1], [], []>} : vector<8x32xf32>, vector<32x128xf32>, vector<8x128xf32> -> vector<8x128xf32>
    %23 = arith.addf %21, %22 : vector<8x128xf32>
    %24 = arith.negf %23 : vector<8x128xf32>
    %25 = math.exp %24 : vector<8x128xf32>
    %cst_14 = arith.constant 1.000000e+00 : f32
    %26 = vector.broadcast %cst_14 : f32 to vector<8x128xf32>
    %27 = arith.addf %26, %25 : vector<8x128xf32>
    %28 = arith.divf %26, %27 : vector<8x128xf32>
    %cst_15 = arith.constant 2.000000e+00 : f32
    %29 = vector.broadcast %cst_15 : f32 to vector<8x128xf32>
    %30 = arith.mulf %29, %28 : vector<8x128xf32>
    %cst_16 = arith.constant 1.000000e+00 : f32
    %31 = vector.broadcast %cst_16 : f32 to vector<8x128xf32>
    %32 = arith.subf %30, %31 : vector<8x128xf32>
    %33 = arith.select %17, %32, %28 : vector<8x128xi1>, vector<8x128xf32>
    %34 = vector.extract_strided_slice %33 {offsets = [0, 0], sizes = [8, 32], strides = [1, 1]} : vector<8x128xf32> to vector<8x32xf32>
    %35 = vector.extract_strided_slice %33 {offsets = [0, 32], sizes = [8, 32], strides = [1, 1]} : vector<8x128xf32> to vector<8x32xf32>
    %36 = vector.extract_strided_slice %33 {offsets = [0, 64], sizes = [8, 32], strides = [1, 1]} : vector<8x128xf32> to vector<8x32xf32>
    %37 = vector.extract_strided_slice %33 {offsets = [0, 96], sizes = [8, 32], strides = [1, 1]} : vector<8x128xf32> to vector<8x32xf32>
    %38 = arith.mulf %35, %20 : vector<8x32xf32>
    %39 = arith.mulf %34, %36 : vector<8x32xf32>
    %40 = arith.addf %38, %39 : vector<8x32xf32>
    %41 = math.tanh %40 : vector<8x32xf32>
    %42 = arith.mulf %37, %41 : vector<8x32xf32>
    %c0_17 = arith.constant 0 : index
    %c0_18 = arith.constant 0 : index
    %43 = vector.load %arg11[%c0_17, %c0_18] : memref<72x32xf32, #tpu.memory_space<vmem>>, vector<8x32xf32>
    tpu.vector_store %arg11[%c0_17, %c0_18], %42 {strides = array<i32>} : memref<72x32xf32, #tpu.memory_space<vmem>>, vector<8x32xf32>,
    %c8 = arith.constant 8 : index
    %c0_19 = arith.constant 0 : index
    %44 = vector.load %arg10[%c8, %c0_19] : memref<72x128xf32, #tpu.memory_space<vmem>>, vector<8x128xf32>
    %cst_20 = arith.constant dense<0.000000e+00> : vector<8x128xf32>
    %45 = tpu.matmul %42, %18, %cst_20 {dimension_numbers = #tpu.dot_dimension_numbers<[1], [0], [0], [1], [0, 0, 1, 1], [], []>} : vector<8x32xf32>, vector<32x128xf32>, vector<8x128xf32> -> vector<8x128xf32>
    %46 = arith.addf %44, %45 : vector<8x128xf32>
    %47 = arith.negf %46 : vector<8x128xf32>
    %48 = math.exp %47 : vector<8x128xf32>
    %cst_21 = arith.constant 1.000000e+00 : f32
    %49 = vector.broadcast %cst_21 : f32 to vector<8x128xf32>
    %50 = arith.addf %49, %48 : vector<8x128xf32>
    %51 = arith.divf %49, %50 : vector<8x128xf32>
    %cst_22 = arith.constant 2.000000e+00 : f32
    %52 = vector.broadcast %cst_22 : f32 to vector<8x128xf32>
    %53 = arith.mulf %52, %51 : vector<8x128xf32>
    %cst_23 = arith.constant 1.000000e+00 : f32
    %54 = vector.broadcast %cst_23 : f32 to vector<8x128xf32>
    %55 = arith.subf %53, %54 : vector<8x128xf32>
    %56 = arith.select %17, %55, %51 : vector<8x128xi1>, vector<8x128xf32>
    %57 = vector.extract_strided_slice %56 {offsets = [0, 0], sizes = [8, 32], strides = [1, 1]} : vector<8x128xf32> to vector<8x32xf32>
    %58 = vector.extract_strided_slice %56 {offsets = [0, 32], sizes = [8, 32], strides = [1, 1]} : vector<8x128xf32> to vector<8x32xf32>
    %59 = vector.extract_strided_slice %56 {offsets = [0, 64], sizes = [8, 32], strides = [1, 1]} : vector<8x128xf32> to vector<8x32xf32>
    %60 = vector.extract_strided_slice %56 {offsets = [0, 96], sizes = [8, 32], strides = [1, 1]} : vector<8x128xf32> to vector<8x32xf32>
    %61 = arith.mulf %58, %40 : vector<8x32xf32>
    %62 = arith.mulf %57, %59 : vector<8x32xf32>
    %63 = arith.addf %61, %62 : vector<8x32xf32>
    %64 = math.tanh %63 : vector<8x32xf32>
    %65 = arith.mulf %60, %64 : vector<8x32xf32>
    %c8_24 = arith.constant 8 : index
    %c0_25 = arith.constant 0 : index
    %66 = vector.load %arg11[%c8_24, %c0_25] : memref<72x32xf32, #tpu.memory_space<vmem>>, vector<8x32xf32>
    tpu.vector_store %arg11[%c8_24, %c0_25], %65 {strides = array<i32>} : memref<72x32xf32, #tpu.memory_space<vmem>>, vector<8x32xf32>,
    %c16 = arith.constant 16 : index
    %c0_26 = arith.constant 0 : index
    %67 = vector.load %arg10[%c16, %c0_26] : memref<72x128xf32, #tpu.memory_space<vmem>>, vector<8x128xf32>
    %cst_27 = arith.constant dense<0.000000e+00> : vector<8x128xf32>
    %68 = tpu.matmul %65, %18, %cst_27 {dimension_numbers = #tpu.dot_dimension_numbers<[1], [0], [0], [1], [0, 0, 1, 1], [], []>} : vector<8x32xf32>, vector<32x128xf32>, vector<8x128xf32> -> vector<8x128xf32>
    %69 = arith.addf %67, %68 : vector<8x128xf32>
    %70 = arith.negf %69 : vector<8x128xf32>
    %71 = math.exp %70 : vector<8x128xf32>
    %cst_28 = arith.constant 1.000000e+00 : f32
    %72 = vector.broadcast %cst_28 : f32 to vector<8x128xf32>
    %73 = arith.addf %72, %71 : vector<8x128xf32>
    %74 = arith.divf %72, %73 : vector<8x128xf32>
    %cst_29 = arith.constant 2.000000e+00 : f32
    %75 = vector.broadcast %cst_29 : f32 to vector<8x128xf32>
    %76 = arith.mulf %75, %74 : vector<8x128xf32>
    %cst_30 = arith.constant 1.000000e+00 : f32
    %77 = vector.broadcast %cst_30 : f32 to vector<8x128xf32>
    %78 = arith.subf %76, %77 : vector<8x128xf32>
    %79 = arith.select %17, %78, %74 : vector<8x128xi1>, vector<8x128xf32>
    %80 = vector.extract_strided_slice %79 {offsets = [0, 0], sizes = [8, 32], strides = [1, 1]} : vector<8x128xf32> to vector<8x32xf32>
    %81 = vector.extract_strided_slice %79 {offsets = [0, 32], sizes = [8, 32], strides = [1, 1]} : vector<8x128xf32> to vector<8x32xf32>
    %82 = vector.extract_strided_slice %79 {offsets = [0, 64], sizes = [8, 32], strides = [1, 1]} : vector<8x128xf32> to vector<8x32xf32>
    %83 = vector.extract_strided_slice %79 {offsets = [0, 96], sizes = [8, 32], strides = [1, 1]} : vector<8x128xf32> to vector<8x32xf32>
    %84 = arith.mulf %81, %63 : vector<8x32xf32>
    %85 = arith.mulf %80, %82 : vector<8x32xf32>
    %86 = arith.addf %84, %85 : vector<8x32xf32>
    %87 = math.tanh %86 : vector<8x32xf32>
    %88 = arith.mulf %83, %87 : vector<8x32xf32>
    %c16_31 = arith.constant 16 : index
    %c0_32 = arith.constant 0 : index
    %89 = vector.load %arg11[%c16_31, %c0_32] : memref<72x32xf32, #tpu.memory_space<vmem>>, vector<8x32xf32>
    tpu.vector_store %arg11[%c16_31, %c0_32], %88 {strides = array<i32>} : memref<72x32xf32, #tpu.memory_space<vmem>>, vector<8x32xf32>,
    %c24 = arith.constant 24 : index
    %c0_33 = arith.constant 0 : index
    %90 = vector.load %arg10[%c24, %c0_33] : memref<72x128xf32, #tpu.memory_space<vmem>>, vector<8x128xf32>
    %cst_34 = arith.constant dense<0.000000e+00> : vector<8x128xf32>
    %91 = tpu.matmul %88, %18, %cst_34 {dimension_numbers = #tpu.dot_dimension_numbers<[1], [0], [0], [1], [0, 0, 1, 1], [], []>} : vector<8x32xf32>, vector<32x128xf32>, vector<8x128xf32> -> vector<8x128xf32>
    %92 = arith.addf %90, %91 : vector<8x128xf32>
    %93 = arith.negf %92 : vector<8x128xf32>
    %94 = math.exp %93 : vector<8x128xf32>
    %cst_35 = arith.constant 1.000000e+00 : f32
    %95 = vector.broadcast %cst_35 : f32 to vector<8x128xf32>
    %96 = arith.addf %95, %94 : vector<8x128xf32>
    %97 = arith.divf %95, %96 : vector<8x128xf32>
    %cst_36 = arith.constant 2.000000e+00 : f32
    %98 = vector.broadcast %cst_36 : f32 to vector<8x128xf32>
    %99 = arith.mulf %98, %97 : vector<8x128xf32>
    %cst_37 = arith.constant 1.000000e+00 : f32
    %100 = vector.broadcast %cst_37 : f32 to vector<8x128xf32>
    %101 = arith.subf %99, %100 : vector<8x128xf32>
    %102 = arith.select %17, %101, %97 : vector<8x128xi1>, vector<8x128xf32>
    %103 = vector.extract_strided_slice %102 {offsets = [0, 0], sizes = [8, 32], strides = [1, 1]} : vector<8x128xf32> to vector<8x32xf32>
    %104 = vector.extract_strided_slice %102 {offsets = [0, 32], sizes = [8, 32], strides = [1, 1]} : vector<8x128xf32> to vector<8x32xf32>
    %105 = vector.extract_strided_slice %102 {offsets = [0, 64], sizes = [8, 32], strides = [1, 1]} : vector<8x128xf32> to vector<8x32xf32>
    %106 = vector.extract_strided_slice %102 {offsets = [0, 96], sizes = [8, 32], strides = [1, 1]} : vector<8x128xf32> to vector<8x32xf32>
    %107 = arith.mulf %104, %86 : vector<8x32xf32>
    %108 = arith.mulf %103, %105 : vector<8x32xf32>
    %109 = arith.addf %107, %108 : vector<8x32xf32>
    %110 = math.tanh %109 : vector<8x32xf32>
    %111 = arith.mulf %106, %110 : vector<8x32xf32>
    %c24_38 = arith.constant 24 : index
    %c0_39 = arith.constant 0 : index
    %112 = vector.load %arg11[%c24_38, %c0_39] : memref<72x32xf32, #tpu.memory_space<vmem>>, vector<8x32xf32>
    tpu.vector_store %arg11[%c24_38, %c0_39], %111 {strides = array<i32>} : memref<72x32xf32, #tpu.memory_space<vmem>>, vector<8x32xf32>,
    %c32 = arith.constant 32 : index
    %c0_40 = arith.constant 0 : index
    %113 = vector.load %arg10[%c32, %c0_40] : memref<72x128xf32, #tpu.memory_space<vmem>>, vector<8x128xf32>
    %cst_41 = arith.constant dense<0.000000e+00> : vector<8x128xf32>
    %114 = tpu.matmul %111, %18, %cst_41 {dimension_numbers = #tpu.dot_dimension_numbers<[1], [0], [0], [1], [0, 0, 1, 1], [], []>} : vector<8x32xf32>, vector<32x128xf32>, vector<8x128xf32> -> vector<8x128xf32>
    %115 = arith.addf %113, %114 : vector<8x128xf32>
    %116 = arith.negf %115 : vector<8x128xf32>
    %117 = math.exp %116 : vector<8x128xf32>
    %cst_42 = arith.constant 1.000000e+00 : f32
    %118 = vector.broadcast %cst_42 : f32 to vector<8x128xf32>
    %119 = arith.addf %118, %117 : vector<8x128xf32>
    %120 = arith.divf %118, %119 : vector<8x128xf32>
    %cst_43 = arith.constant 2.000000e+00 : f32
    %121 = vector.broadcast %cst_43 : f32 to vector<8x128xf32>
    %122 = arith.mulf %121, %120 : vector<8x128xf32>
    %cst_44 = arith.constant 1.000000e+00 : f32
    %123 = vector.broadcast %cst_44 : f32 to vector<8x128xf32>
    %124 = arith.subf %122, %123 : vector<8x128xf32>
    %125 = arith.select %17, %124, %120 : vector<8x128xi1>, vector<8x128xf32>
    %126 = vector.extract_strided_slice %125 {offsets = [0, 0], sizes = [8, 32], strides = [1, 1]} : vector<8x128xf32> to vector<8x32xf32>
    %127 = vector.extract_strided_slice %125 {offsets = [0, 32], sizes = [8, 32], strides = [1, 1]} : vector<8x128xf32> to vector<8x32xf32>
    %128 = vector.extract_strided_slice %125 {offsets = [0, 64], sizes = [8, 32], strides = [1, 1]} : vector<8x128xf32> to vector<8x32xf32>
    %129 = vector.extract_strided_slice %125 {offsets = [0, 96], sizes = [8, 32], strides = [1, 1]} : vector<8x128xf32> to vector<8x32xf32>
    %130 = arith.mulf %127, %109 : vector<8x32xf32>
    %131 = arith.mulf %126, %128 : vector<8x32xf32>
    %132 = arith.addf %130, %131 : vector<8x32xf32>
    %133 = math.tanh %132 : vector<8x32xf32>
    %134 = arith.mulf %129, %133 : vector<8x32xf32>
    %c32_45 = arith.constant 32 : index
    %c0_46 = arith.constant 0 : index
    %135 = vector.load %arg11[%c32_45, %c0_46] : memref<72x32xf32, #tpu.memory_space<vmem>>, vector<8x32xf32>
    tpu.vector_store %arg11[%c32_45, %c0_46], %134 {strides = array<i32>} : memref<72x32xf32, #tpu.memory_space<vmem>>, vector<8x32xf32>,
    %c40 = arith.constant 40 : index
    %c0_47 = arith.constant 0 : index
    %136 = vector.load %arg10[%c40, %c0_47] : memref<72x128xf32, #tpu.memory_space<vmem>>, vector<8x128xf32>
    %cst_48 = arith.constant dense<0.000000e+00> : vector<8x128xf32>
    %137 = tpu.matmul %134, %18, %cst_48 {dimension_numbers = #tpu.dot_dimension_numbers<[1], [0], [0], [1], [0, 0, 1, 1], [], []>} : vector<8x32xf32>, vector<32x128xf32>, vector<8x128xf32> -> vector<8x128xf32>
    %138 = arith.addf %136, %137 : vector<8x128xf32>
    %139 = arith.negf %138 : vector<8x128xf32>
    %140 = math.exp %139 : vector<8x128xf32>
    %cst_49 = arith.constant 1.000000e+00 : f32
    %141 = vector.broadcast %cst_49 : f32 to vector<8x128xf32>
    %142 = arith.addf %141, %140 : vector<8x128xf32>
    %143 = arith.divf %141, %142 : vector<8x128xf32>
    %cst_50 = arith.constant 2.000000e+00 : f32
    %144 = vector.broadcast %cst_50 : f32 to vector<8x128xf32>
    %145 = arith.mulf %144, %143 : vector<8x128xf32>
    %cst_51 = arith.constant 1.000000e+00 : f32
    %146 = vector.broadcast %cst_51 : f32 to vector<8x128xf32>
    %147 = arith.subf %145, %146 : vector<8x128xf32>
    %148 = arith.select %17, %147, %143 : vector<8x128xi1>, vector<8x128xf32>
    %149 = vector.extract_strided_slice %148 {offsets = [0, 0], sizes = [8, 32], strides = [1, 1]} : vector<8x128xf32> to vector<8x32xf32>
    %150 = vector.extract_strided_slice %148 {offsets = [0, 32], sizes = [8, 32], strides = [1, 1]} : vector<8x128xf32> to vector<8x32xf32>
    %151 = vector.extract_strided_slice %148 {offsets = [0, 64], sizes = [8, 32], strides = [1, 1]} : vector<8x128xf32> to vector<8x32xf32>
    %152 = vector.extract_strided_slice %148 {offsets = [0, 96], sizes = [8, 32], strides = [1, 1]} : vector<8x128xf32> to vector<8x32xf32>
    %153 = arith.mulf %150, %132 : vector<8x32xf32>
    %154 = arith.mulf %149, %151 : vector<8x32xf32>
    %155 = arith.addf %153, %154 : vector<8x32xf32>
    %156 = math.tanh %155 : vector<8x32xf32>
    %157 = arith.mulf %152, %156 : vector<8x32xf32>
    %c40_52 = arith.constant 40 : index
    %c0_53 = arith.constant 0 : index
    %158 = vector.load %arg11[%c40_52, %c0_53] : memref<72x32xf32, #tpu.memory_space<vmem>>, vector<8x32xf32>
    tpu.vector_store %arg11[%c40_52, %c0_53], %157 {strides = array<i32>} : memref<72x32xf32, #tpu.memory_space<vmem>>, vector<8x32xf32>,
    %c48 = arith.constant 48 : index
    %c0_54 = arith.constant 0 : index
    %159 = vector.load %arg10[%c48, %c0_54] : memref<72x128xf32, #tpu.memory_space<vmem>>, vector<8x128xf32>
    %cst_55 = arith.constant dense<0.000000e+00> : vector<8x128xf32>
    %160 = tpu.matmul %157, %18, %cst_55 {dimension_numbers = #tpu.dot_dimension_numbers<[1], [0], [0], [1], [0, 0, 1, 1], [], []>} : vector<8x32xf32>, vector<32x128xf32>, vector<8x128xf32> -> vector<8x128xf32>
    %161 = arith.addf %159, %160 : vector<8x128xf32>
    %162 = arith.negf %161 : vector<8x128xf32>
    %163 = math.exp %162 : vector<8x128xf32>
    %cst_56 = arith.constant 1.000000e+00 : f32
    %164 = vector.broadcast %cst_56 : f32 to vector<8x128xf32>
    %165 = arith.addf %164, %163 : vector<8x128xf32>
    %166 = arith.divf %164, %165 : vector<8x128xf32>
    %cst_57 = arith.constant 2.000000e+00 : f32
    %167 = vector.broadcast %cst_57 : f32 to vector<8x128xf32>
    %168 = arith.mulf %167, %166 : vector<8x128xf32>
    %cst_58 = arith.constant 1.000000e+00 : f32
    %169 = vector.broadcast %cst_58 : f32 to vector<8x128xf32>
    %170 = arith.subf %168, %169 : vector<8x128xf32>
    %171 = arith.select %17, %170, %166 : vector<8x128xi1>, vector<8x128xf32>
    %172 = vector.extract_strided_slice %171 {offsets = [0, 0], sizes = [8, 32], strides = [1, 1]} : vector<8x128xf32> to vector<8x32xf32>
    %173 = vector.extract_strided_slice %171 {offsets = [0, 32], sizes = [8, 32], strides = [1, 1]} : vector<8x128xf32> to vector<8x32xf32>
    %174 = vector.extract_strided_slice %171 {offsets = [0, 64], sizes = [8, 32], strides = [1, 1]} : vector<8x128xf32> to vector<8x32xf32>
    %175 = vector.extract_strided_slice %171 {offsets = [0, 96], sizes = [8, 32], strides = [1, 1]} : vector<8x128xf32> to vector<8x32xf32>
    %176 = arith.mulf %173, %155 : vector<8x32xf32>
    %177 = arith.mulf %172, %174 : vector<8x32xf32>
    %178 = arith.addf %176, %177 : vector<8x32xf32>
    %179 = math.tanh %178 : vector<8x32xf32>
    %180 = arith.mulf %175, %179 : vector<8x32xf32>
    %c48_59 = arith.constant 48 : index
    %c0_60 = arith.constant 0 : index
    %181 = vector.load %arg11[%c48_59, %c0_60] : memref<72x32xf32, #tpu.memory_space<vmem>>, vector<8x32xf32>
    tpu.vector_store %arg11[%c48_59, %c0_60], %180 {strides = array<i32>} : memref<72x32xf32, #tpu.memory_space<vmem>>, vector<8x32xf32>,
    %c56 = arith.constant 56 : index
    %c0_61 = arith.constant 0 : index
    %182 = vector.load %arg10[%c56, %c0_61] : memref<72x128xf32, #tpu.memory_space<vmem>>, vector<8x128xf32>
    %cst_62 = arith.constant dense<0.000000e+00> : vector<8x128xf32>
    %183 = tpu.matmul %180, %18, %cst_62 {dimension_numbers = #tpu.dot_dimension_numbers<[1], [0], [0], [1], [0, 0, 1, 1], [], []>} : vector<8x32xf32>, vector<32x128xf32>, vector<8x128xf32> -> vector<8x128xf32>
    %184 = arith.addf %182, %183 : vector<8x128xf32>
    %185 = arith.negf %184 : vector<8x128xf32>
    %186 = math.exp %185 : vector<8x128xf32>
    %cst_63 = arith.constant 1.000000e+00 : f32
    %187 = vector.broadcast %cst_63 : f32 to vector<8x128xf32>
    %188 = arith.addf %187, %186 : vector<8x128xf32>
    %189 = arith.divf %187, %188 : vector<8x128xf32>
    %cst_64 = arith.constant 2.000000e+00 : f32
    %190 = vector.broadcast %cst_64 : f32 to vector<8x128xf32>
    %191 = arith.mulf %190, %189 : vector<8x128xf32>
    %cst_65 = arith.constant 1.000000e+00 : f32
    %192 = vector.broadcast %cst_65 : f32 to vector<8x128xf32>
    %193 = arith.subf %191, %192 : vector<8x128xf32>
    %194 = arith.select %17, %193, %189 : vector<8x128xi1>, vector<8x128xf32>
    %195 = vector.extract_strided_slice %194 {offsets = [0, 0], sizes = [8, 32], strides = [1, 1]} : vector<8x128xf32> to vector<8x32xf32>
    %196 = vector.extract_strided_slice %194 {offsets = [0, 32], sizes = [8, 32], strides = [1, 1]} : vector<8x128xf32> to vector<8x32xf32>
    %197 = vector.extract_strided_slice %194 {offsets = [0, 64], sizes = [8, 32], strides = [1, 1]} : vector<8x128xf32> to vector<8x32xf32>
    %198 = vector.extract_strided_slice %194 {offsets = [0, 96], sizes = [8, 32], strides = [1, 1]} : vector<8x128xf32> to vector<8x32xf32>
    %199 = arith.mulf %196, %178 : vector<8x32xf32>
    %200 = arith.mulf %195, %197 : vector<8x32xf32>
    %201 = arith.addf %199, %200 : vector<8x32xf32>
    %202 = math.tanh %201 : vector<8x32xf32>
    %203 = arith.mulf %198, %202 : vector<8x32xf32>
    %c56_66 = arith.constant 56 : index
    %c0_67 = arith.constant 0 : index
    %204 = vector.load %arg11[%c56_66, %c0_67] : memref<72x32xf32, #tpu.memory_space<vmem>>, vector<8x32xf32>
    tpu.vector_store %arg11[%c56_66, %c0_67], %203 {strides = array<i32>} : memref<72x32xf32, #tpu.memory_space<vmem>>, vector<8x32xf32>,
    %c64 = arith.constant 64 : index
    %c0_68 = arith.constant 0 : index
    %205 = vector.load %arg10[%c64, %c0_68] : memref<72x128xf32, #tpu.memory_space<vmem>>, vector<8x128xf32>
    %cst_69 = arith.constant dense<0.000000e+00> : vector<8x128xf32>
    %206 = tpu.matmul %203, %18, %cst_69 {dimension_numbers = #tpu.dot_dimension_numbers<[1], [0], [0], [1], [0, 0, 1, 1], [], []>} : vector<8x32xf32>, vector<32x128xf32>, vector<8x128xf32> -> vector<8x128xf32>
    %207 = arith.addf %205, %206 : vector<8x128xf32>
    %208 = arith.negf %207 : vector<8x128xf32>
    %209 = math.exp %208 : vector<8x128xf32>
    %cst_70 = arith.constant 1.000000e+00 : f32
    %210 = vector.broadcast %cst_70 : f32 to vector<8x128xf32>
    %211 = arith.addf %210, %209 : vector<8x128xf32>
    %212 = arith.divf %210, %211 : vector<8x128xf32>
    %cst_71 = arith.constant 2.000000e+00 : f32
    %213 = vector.broadcast %cst_71 : f32 to vector<8x128xf32>
    %214 = arith.mulf %213, %212 : vector<8x128xf32>
    %cst_72 = arith.constant 1.000000e+00 : f32
    %215 = vector.broadcast %cst_72 : f32 to vector<8x128xf32>
    %216 = arith.subf %214, %215 : vector<8x128xf32>
    %217 = arith.select %17, %216, %212 : vector<8x128xi1>, vector<8x128xf32>
    %218 = vector.extract_strided_slice %217 {offsets = [0, 0], sizes = [8, 32], strides = [1, 1]} : vector<8x128xf32> to vector<8x32xf32>
    %219 = vector.extract_strided_slice %217 {offsets = [0, 32], sizes = [8, 32], strides = [1, 1]} : vector<8x128xf32> to vector<8x32xf32>
    %220 = vector.extract_strided_slice %217 {offsets = [0, 64], sizes = [8, 32], strides = [1, 1]} : vector<8x128xf32> to vector<8x32xf32>
    %221 = vector.extract_strided_slice %217 {offsets = [0, 96], sizes = [8, 32], strides = [1, 1]} : vector<8x128xf32> to vector<8x32xf32>
    %222 = arith.mulf %219, %201 : vector<8x32xf32>
    %223 = arith.mulf %218, %220 : vector<8x32xf32>
    %224 = arith.addf %222, %223 : vector<8x32xf32>
    %225 = math.tanh %224 : vector<8x32xf32>
    %226 = arith.mulf %221, %225 : vector<8x32xf32>
    %c64_73 = arith.constant 64 : index
    %c0_74 = arith.constant 0 : index
    %227 = vector.load %arg11[%c64_73, %c0_74] : memref<72x32xf32, #tpu.memory_space<vmem>>, vector<8x32xf32>
    tpu.vector_store %arg11[%c64_73, %c0_74], %226 {strides = array<i32>} : memref<72x32xf32, #tpu.memory_space<vmem>>, vector<8x32xf32>,
    %c0_75 = arith.constant 0 : index
    %c0_76 = arith.constant 0 : index
    %228 = vector.load %arg11[%c0_75, %c0_76] : memref<72x32xf32, #tpu.memory_space<vmem>>, vector<72x32xf32>
    %c0_77 = arith.constant 0 : index
    %c0_78 = arith.constant 0 : index
    %229 = vector.load %arg1[%c0_77, %c0_78] : memref<72x1xf32, #tpu.memory_space<vmem>>, vector<72x1xf32>
    %230 = vector.broadcast %229 : vector<72x1xf32> to vector<72x32xf32>
    %231 = arith.mulf %228, %230 : vector<72x32xf32>
    %c0_79 = arith.constant 0 : index
    %c0_80 = arith.constant 0 : index
    %232 = vector.load %arg5[%c0_79, %c0_80] : memref<32x128xf32, #tpu.memory_space<vmem>>, vector<32x128xf32>
    %cst_81 = arith.constant dense<0.000000e+00> : vector<72x128xf32>
    %233 = tpu.matmul %231, %232, %cst_81 {dimension_numbers = #tpu.dot_dimension_numbers<[1], [0], [0], [1], [0, 0, 1, 1], [], []>} : vector<72x32xf32>, vector<32x128xf32>, vector<72x128xf32> -> vector<72x128xf32>
    %c0_82 = arith.constant 0 : index
    %c0_83 = arith.constant 0 : index
    %234 = vector.load %arg6[%c0_82, %c0_83] : memref<1x128xf32, #tpu.memory_space<vmem>>, vector<1x128xf32>
    %235 = vector.broadcast %234 : vector<1x128xf32> to vector<72x128xf32>
    %236 = arith.addf %233, %235 : vector<72x128xf32>
    %c0_84 = arith.constant 0 : index
    %c0_85 = arith.constant 0 : index
    %237 = vector.load %arg7[%c0_84, %c0_85] : memref<72x128xf32, #tpu.memory_space<vmem>>, vector<72x128xf32>
    %cst_86 = arith.constant 1.000000e-10 : f32
    %238 = vector.broadcast %cst_86 : f32 to vector<72x128xf32>
    %239 = arith.addf %237, %238 : vector<72x128xf32>
    %240 = math.log %239 : vector<72x128xf32>
    %cst_87 = arith.constant 0.000000e+00 : f32
    %241 = vector.broadcast %cst_87 : f32 to vector<72x128xf32>
    %242 = arith.subf %241, %240 : vector<72x128xf32>
    %cst_88 = arith.constant 1.000000e-10 : f32
    %243 = vector.broadcast %cst_88 : f32 to vector<72x128xf32>
    %244 = arith.addf %242, %243 : vector<72x128xf32>
    %245 = math.log %244 : vector<72x128xf32>
    %cst_89 = arith.constant 0.000000e+00 : f32
    %246 = vector.broadcast %cst_89 : f32 to vector<72x128xf32>
    %247 = arith.subf %246, %245 : vector<72x128xf32>
    %248 = arith.addf %236, %247 : vector<72x128xf32>
    %cst_90 = arith.constant 1.000000e+00 : f32
    %249 = vector.broadcast %cst_90 : f32 to vector<72x128xf32>
    %250 = arith.mulf %248, %249 : vector<72x128xf32>
    %cst_91 = arith.constant dense<0xFF800000> : vector<72xf32>
    %251 = vector.multi_reduction <maximumf>, %250, %cst_91 [1] : vector<72x128xf32> to vector<72xf32>
    %252 = vector.shape_cast %251 : vector<72xf32> to vector<72x1xf32>
    %253 = vector.broadcast %252 : vector<72x1xf32> to vector<72x128xf32>
    %254 = arith.subf %250, %253 : vector<72x128xf32>
    %255 = math.exp %254 : vector<72x128xf32>
    %cst_92 = arith.constant dense<0.000000e+00> : vector<72xf32>
    %256 = vector.multi_reduction <add>, %255, %cst_92 [1] : vector<72x128xf32> to vector<72xf32>
    %257 = vector.shape_cast %256 : vector<72xf32> to vector<72x1xf32>
    %258 = tpu.reciprocal %257 {approx = true} : vector<72x1xf32> -> vector<72x1xf32>
    %259 = vector.broadcast %258 : vector<72x1xf32> to vector<72x128xf32>
    %260 = arith.mulf %255, %259 : vector<72x128xf32>
    %c0_93 = arith.constant 0 : index
    %c0_94 = arith.constant 0 : index
    %261 = vector.load %arg8[%c0_93, %c0_94] : memref<72x128xf32, #tpu.memory_space<vmem>>, vector<72x128xf32>
    tpu.vector_store %arg8[%c0_93, %c0_94], %260 {strides = array<i32>} : memref<72x128xf32, #tpu.memory_space<vmem>>, vector<72x128xf32>,
    %262 = tpu.iota {dimensions = array<i32: 1>} : vector<72x128xi32>
    %263 = vector.broadcast %252 : vector<72x1xf32> to vector<72x128xf32>
    %264 = arith.cmpf oge, %250, %263 : vector<72x128xf32>
    %c128_i32 = arith.constant 128 : i32
    %265 = vector.broadcast %c128_i32 : i32 to vector<72x128xi32>
    %266 = arith.select %264, %262, %265 : vector<72x128xi1>, vector<72x128xi32>
    %cst_95 = arith.constant dense<2147483647> : vector<72xi32>
    %267 = vector.multi_reduction <minsi>, %266, %cst_95 [1] : vector<72x128xi32> to vector<72xi32>
    %268 = vector.shape_cast %267 : vector<72xi32> to vector<72x1xi32>
    %c0_96 = arith.constant 0 : index
    %c0_97 = arith.constant 0 : index
    %269 = vector.load %arg9[%c0_96, %c0_97] : memref<72x1xi32, #tpu.memory_space<vmem>>, vector<72x1xi32>
    tpu.vector_store %arg9[%c0_96, %c0_97], %268 {strides = array<i32>} : memref<72x1xi32, #tpu.memory_space<vmem>>, vector<72x1xi32>,
    return
  }
}

</mosaic_0001>

<llo_original>
// kernel: tpu_custom_call.1
$region0: #{tpu_custom_call.1}
  #allocation0 [shape = 'u32[]', space=smem, size = 0x4, offset = 0x4, fixed_abs, tag = 'smem constant byte address 0x4 - core index']
  #allocation1 [shape = 'u32[144,128]{1,0:T(1,128)}', space=vmem, size = 0x12000, scoped, tag = 'internal scratch']
  #allocation2 [shape = 'f32[72,128]{1,0:T(8,128)}', space=vmem, size = 0x9000, scoped, tag = 'scratch operand']
  #allocation3 [shape = 'f32[72,32]{1,0:T(8,128)}', space=vmem, size = 0x9000, scoped, tag = 'scratch operand']
  %s0 = inlined_call_operand.vmem [shape: s32[72,1], index: 0, kind: input, shape index: {}]
  %s1 = inlined_call_operand.vmem [shape: f32[72,1], index: 1, kind: input, shape index: {}]
  %s2 = inlined_call_operand.vmem [shape: f32[128,128], index: 2, kind: input, shape index: {}]
  %s3 = inlined_call_operand.hbm [shape: f32[32,128], index: 3, kind: input, shape index: {}]
  %s4 = inlined_call_operand.vmem [shape: f32[1,128], index: 4, kind: input, shape index: {}]
  %s5 = inlined_call_operand.vmem [shape: f32[32,128], index: 5, kind: input, shape index: {}]
  %s6 = inlined_call_operand.vmem [shape: f32[1,128], index: 6, kind: input, shape index: {}]
  %s7 = inlined_call_operand.hbm [shape: f32[72,128], index: 7, kind: input, shape index: {}]
  %s8 = inlined_call_operand.hbm [shape: f32[72,128], index: 8, kind: output, shape index: {0}]
  %s9 = inlined_call_operand.vmem [shape: s32[72,1], index: 9, kind: output, shape index: {1}]
  %10 = xla_tuple %s8, %s9
  %s11 = sld [smem:[#allocation0]]
  $region58: #{tpu_custom_call.1} parent=0
    _
  %s13 = ssub.s32 1, %s11
  %s14 = scalar_select 0, %s13, %s11
  $region1: #{tpu_custom_call.1} parent=0
    #allocation4 [shape = 'u8[16384]{0}', space=vmem, size = 0x4000, scoped, tag = 'input window, operand 3, single buffered']
    #allocation5 [shape = 's32[1]{0}', space=sflag, size = 0x4, scoped, tag = 'scoped memory for tpu_custom_call.1']
    #allocation6 [shape = 's32[1]{0}', space=sflag, size = 0x4, scoped, tag = 'scoped memory for tpu_custom_call.1']
    #allocation7 [shape = 'u8[36864]{0}', space=vmem, size = 0x9000, scoped, tag = 'input window, operand 7, single buffered']
    #allocation8 [shape = 's32[1]{0}', space=sflag, size = 0x4, scoped, tag = 'scoped memory for tpu_custom_call.1']
    #allocation9 [shape = 'u8[36864]{0}', space=vmem, size = 0x9000, scoped, tag = 'output window, operand 0, single buffered']
    %15 = vsyncpa [#allocation5], 0
    %16 = vsyncpa [#allocation8], 0
    %17 = vsyncpa [#allocation6], 0
    // Predicated region
    $region2: #{tpu_custom_call.1} parent=1 // pred_check
      _
    $region3: #{tpu_custom_call.1} parent=1 // pred_check_branch
      %19 = sbr.rel (0) target = $region5
    $region4: #{tpu_custom_call.1} parent=1 // pred_region
      _
    $region5: #{tpu_custom_call.1} parent=1 // pred_fallthru
      _
    // Predicated region
    $region6: #{tpu_custom_call.1} parent=1 // pred_check
      _
    $region7: #{tpu_custom_call.1} parent=1 // pred_check_branch
      %21 = sbr.rel (0) target = $region9
    $region8: #{tpu_custom_call.1} parent=1 // pred_region
      _
    $region9: #{tpu_custom_call.1} parent=1 // pred_fallthru
      _
    // Predicated region
    $region10: #{tpu_custom_call.1} parent=1 // pred_check
      _
    $region11: #{tpu_custom_call.1} parent=1 // pred_check_branch
      %23 = sbr.rel (0) target = $region13
    $region12: #{tpu_custom_call.1} parent=1 // pred_region
      _
    $region13: #{tpu_custom_call.1} parent=1 // pred_fallthru
      _
    // Predicated region
    $region14: #{tpu_custom_call.1} parent=1 // pred_check
      _
    $region15: #{tpu_custom_call.1} parent=1 // pred_check_branch
      %25 = sbr.rel (0) target = $region17
    $region16: #{tpu_custom_call.1} parent=1 // pred_region
      %s27 = ssub.s32 512, 512
      %28 = vsyncadd [#allocation5], %s27
      %s29 = sshll.u32 [#allocation4], 4
      %s30 = int_to_ptr.vmem [resolvable:$true] %s29
      %35 = dma.hbm_to_vmem [thread:$0]  %s3, 512, %s30, [#allocation5], 128, 128, 8
    $region17: #{tpu_custom_call.1} parent=1 // pred_fallthru
      _
    // Predicated region
    $region18: #{tpu_custom_call.1} parent=1 // pred_check
      _
    $region19: #{tpu_custom_call.1} parent=1 // pred_check_branch
      %37 = sbr.rel (0) target = $region21
    $region20: #{tpu_custom_call.1} parent=1 // pred_region
      _
    $region21: #{tpu_custom_call.1} parent=1 // pred_fallthru
      _
    // Predicated region
    $region22: #{tpu_custom_call.1} parent=1 // pred_check
      _
    $region23: #{tpu_custom_call.1} parent=1 // pred_check_branch
      %39 = sbr.rel (0) target = $region25
    $region24: #{tpu_custom_call.1} parent=1 // pred_region
      _
    $region25: #{tpu_custom_call.1} parent=1 // pred_fallthru
      _
    // Predicated region
    $region26: #{tpu_custom_call.1} parent=1 // pred_check
      _
    $region27: #{tpu_custom_call.1} parent=1 // pred_check_branch
      %41 = sbr.rel (0) target = $region29
    $region28: #{tpu_custom_call.1} parent=1 // pred_region
      _
    $region29: #{tpu_custom_call.1} parent=1 // pred_fallthru
      _
    // Predicated region
    $region30: #{tpu_custom_call.1} parent=1 // pred_check
      _
    $region31: #{tpu_custom_call.1} parent=1 // pred_check_branch
      %43 = sbr.rel (0) target = $region33
    $region32: #{tpu_custom_call.1} parent=1 // pred_region
      %s45 = ssub.s32 1152, 1152
      %46 = vsyncadd [#allocation8], %s45
      %s47 = sshll.u32 [#allocation7], 4
      %s48 = int_to_ptr.vmem [resolvable:$true] %s47
      %53 = dma.hbm_to_vmem [thread:$0]  %s7, 1152, %s48, [#allocation8], 128, 128, 8
    $region33: #{tpu_custom_call.1} parent=1 // pred_fallthru
      _
    // Predicated region
    $region34: #{tpu_custom_call.1} parent=1 // pred_check
      _
    $region35: #{tpu_custom_call.1} parent=1 // pred_check_branch
      %55 = sbr.rel (0) target = $region37
    $region36: #{tpu_custom_call.1} parent=1 // pred_region
      %56 = dma.done [#allocation5], 512
    $region37: #{tpu_custom_call.1} parent=1 // pred_fallthru
      _
    // Predicated region
    $region38: #{tpu_custom_call.1} parent=1 // pred_check
      _
    $region39: #{tpu_custom_call.1} parent=1 // pred_check_branch
      %58 = sbr.rel (0) target = $region41
    $region40: #{tpu_custom_call.1} parent=1 // pred_region
      %59 = dma.done [#allocation8], 1152
    $region41: #{tpu_custom_call.1} parent=1 // pred_fallthru
      _
    %v60 = vlaneseq
    %v61 = vand.u32 %v60, 127
    %v62 = vld [vmem:[%s0] sm:$0xff]
    %v63 = vld [vmem:[%s0 + $0x8] sm:$0xff]
    %v64 = vld [vmem:[%s0 + $0x10] sm:$0xff]
    %v65 = vld [vmem:[%s0 + $0x18] sm:$0xff]
    %v66 = vld [vmem:[%s0 + $0x20] sm:$0xff]
    %v67 = vld [vmem:[%s0 + $0x28] sm:$0xff]
    %v68 = vld [vmem:[%s0 + $0x30] sm:$0xff]
    %v69 = vld [vmem:[%s0 + $0x38] sm:$0xff]
    %v70 = vld [vmem:[%s0 + $0x40] sm:$0xff]
    %71 = vset.pattern.permute.xlu0 0
    %72 = vperm.xlu0 %71, %v62
    %v73 = vpop.permute.xlu0 %72
    %74 = vset.pattern.permute.xlu0 0
    %75 = vperm.xlu0 %74, %v63
    %v76 = vpop.permute.xlu0 %75
    %77 = vset.pattern.permute.xlu0 0
    %78 = vperm.xlu0 %77, %v64
    %v79 = vpop.permute.xlu0 %78
    %80 = vset.pattern.permute.xlu0 0
    %81 = vperm.xlu0 %80, %v65
    %v82 = vpop.permute.xlu0 %81
    %83 = vset.pattern.permute.xlu0 0
    %84 = vperm.xlu0 %83, %v66
    %v85 = vpop.permute.xlu0 %84
    %86 = vset.pattern.permute.xlu0 0
    %87 = vperm.xlu0 %86, %v67
    %v88 = vpop.permute.xlu0 %87
    %89 = vset.pattern.permute.xlu0 0
    %90 = vperm.xlu0 %89, %v68
    %v91 = vpop.permute.xlu0 %90
    %92 = vset.pattern.permute.xlu0 0
    %93 = vperm.xlu0 %92, %v69
    %v94 = vpop.permute.xlu0 %93
    %95 = vset.pattern.permute.xlu0 0
    %96 = vperm.xlu0 %95, %v70
    %v97 = vpop.permute.xlu0 %96
    %vm98 = vcmp.eq.s32.totalorder %v73, %v61
    %vm99 = vcmp.eq.s32.totalorder %v76, %v61
    %vm100 = vcmp.eq.s32.totalorder %v79, %v61
    %vm101 = vcmp.eq.s32.totalorder %v82, %v61
    %vm102 = vcmp.eq.s32.totalorder %v85, %v61
    %vm103 = vcmp.eq.s32.totalorder %v88, %v61
    %vm104 = vcmp.eq.s32.totalorder %v91, %v61
    %vm105 = vcmp.eq.s32.totalorder %v94, %v61
    %vm106 = vcmp.eq.s32.totalorder %v97, %v61
    %v107 = vsel %vm98, 1, 0
    %v108 = vsel %vm99, 1, 0
    %v109 = vsel %vm100, 1, 0
    %v110 = vsel %vm101, 1, 0
    %v111 = vsel %vm102, 1, 0
    %v112 = vsel %vm103, 1, 0
    %v113 = vsel %vm104, 1, 0
    %v114 = vsel %vm105, 1, 0
    %v115 = vsel %vm106, 1, 0
    %v116 = vcvt.s32.f32 %v107
    %v117 = vcvt.s32.f32 %v108
    %v118 = vcvt.s32.f32 %v109
    %v119 = vcvt.s32.f32 %v110
    %v120 = vcvt.s32.f32 %v111
    %v121 = vcvt.s32.f32 %v112
    %v122 = vcvt.s32.f32 %v113
    %v123 = vcvt.s32.f32 %v114
    %v124 = vcvt.s32.f32 %v115
    %v125 = vld [vmem:[%s2] sm:$0xff]
    %v126 = vld [vmem:[%s2 + $0x8] sm:$0xff]
    %v127 = vld [vmem:[%s2 + $0x10] sm:$0xff]
    %v128 = vld [vmem:[%s2 + $0x18] sm:$0xff]
    %v129 = vld [vmem:[%s2 + $0x20] sm:$0xff]
    %v130 = vld [vmem:[%s2 + $0x28] sm:$0xff]
    %v131 = vld [vmem:[%s2 + $0x30] sm:$0xff]
    %v132 = vld [vmem:[%s2 + $0x38] sm:$0xff]
    %v133 = vld [vmem:[%s2 + $0x40] sm:$0xff]
    %v134 = vld [vmem:[%s2 + $0x48] sm:$0xff]
    %v135 = vld [vmem:[%s2 + $0x50] sm:$0xff]
    %v136 = vld [vmem:[%s2 + $0x58] sm:$0xff]
    %v137 = vld [vmem:[%s2 + $0x60] sm:$0xff]
    %v138 = vld [vmem:[%s2 + $0x68] sm:$0xff]
    %v139 = vld [vmem:[%s2 + $0x70] sm:$0xff]
    %v140 = vld [vmem:[%s2 + $0x78] sm:$0xff]
    %v141 = vld [vmem:[%s4] sm:$0x1]
    %v143 = vlaneseq
    %v144 = vshrl.u32 %v143, 7
    %v145 = vsub.s32 0, %v144
    %v146 = vrot.slane %v141, %v145
    %148 = vmatprep.subr.mxu0 0.0
    %149 = vmatpush1.msra.mxu0 %v125
    %150 = vmatprep.subr.mxu0 0.0
    %151 = vmatpush1.msra.mxu0 %v126
    %152 = vmatprep.subr.mxu0 0.0
    %153 = vmatpush1.msra.mxu0 %v127
    %154 = vmatprep.subr.mxu0 0.0
    %155 = vmatpush1.msra.mxu0 %v128
    %156 = vmatprep.subr.mxu0 0.0
    %157 = vmatpush1.msra.mxu0 %v129
    %158 = vmatprep.subr.mxu0 0.0
    %159 = vmatpush1.msra.mxu0 %v130
    %160 = vmatprep.subr.mxu0 0.0
    %161 = vmatpush1.msra.mxu0 %v131
    %162 = vmatprep.subr.mxu0 0.0
    %163 = vmatpush1.msra.mxu0 %v132
    %164 = vmatprep.subr.mxu0 0.0
    %165 = vmatpush1.msra.mxu0 %v133
    %166 = vmatprep.subr.mxu0 0.0
    %167 = vmatpush1.msra.mxu0 %v134
    %168 = vmatprep.subr.mxu0 0.0
    %169 = vmatpush1.msra.mxu0 %v135
    %170 = vmatprep.subr.mxu0 0.0
    %171 = vmatpush1.msra.mxu0 %v136
    %172 = vmatprep.subr.mxu0 0.0
    %173 = vmatpush1.msra.mxu0 %v137
    %174 = vmatprep.subr.mxu0 0.0
    %175 = vmatpush1.msra.mxu0 %v138
    %176 = vmatprep.subr.mxu0 0.0
    %177 = vmatpush1.msra.mxu0 %v139
    %178 = vmatprep.subr.mxu0 0.0
    %179 = vmatpush1.msra.mxu0 %v140
    %180 = vmatprep.subr.mxu0 0.0
    %181 = vmatpush1.msra.mxu0 0.0
    %182 = vmatprep.subr.mxu0 0.0
    %183 = vmatpush1.msra.mxu0 0.0
    %184 = vmatprep.subr.mxu0 0.0
    %185 = vmatpush1.msra.mxu0 0.0
    %186 = vmatprep.subr.mxu0 0.0
    %187 = vmatpush1.msra.mxu0 0.0
    %188 = vmatprep.subr.mxu0 0.0
    %189 = vmatpush1.msra.mxu0 0.0
    %190 = vmatprep.subr.mxu0 0.0
    %191 = vmatpush1.msra.mxu0 0.0
    %192 = vmatprep.subr.mxu0 0.0
    %193 = vmatpush1.msra.mxu0 0.0
    %194 = vmatprep.subr.mxu0 0.0
    %195 = vmatpush1.msra.mxu0 0.0
    %196 = vmatprep.subr.mxu0 0.0
    %197 = vmatpush1.msra.mxu0 0.0
    %198 = vmatprep.subr.mxu0 0.0
    %199 = vmatpush1.msra.mxu0 0.0
    %200 = vmatprep.subr.mxu0 0.0
    %201 = vmatpush1.msra.mxu0 0.0
    %202 = vmatprep.subr.mxu0 0.0
    %203 = vmatpush1.msra.mxu0 0.0
    %204 = vmatprep.subr.mxu0 0.0
    %205 = vmatpush1.msra.mxu0 0.0
    %206 = vmatprep.subr.mxu0 0.0
    %207 = vmatpush1.msra.mxu0 0.0
    %208 = vmatprep.subr.mxu0 0.0
    %209 = vmatpush1.msra.mxu0 0.0
    %210 = vmatprep.subr.mxu0 0.0
    %211 = vmatpush1.msra.mxu0 0.0
    %212 = vmatprep.mubr.f32.mxu0 0.0
    %213 = vmatmul.mubr.f32.gmra.mrb[0].mxu0 %v116
    %v214 = vpop.f32.mrb[0].mxu0
    %v215 = vadd.f32 %v146, %v214
    %v216 = vpop.f32.mrb[0].mxu0
    %217 = vmatprep.mubr.f32.mxu0 0.0
    %218 = vmatmul.mubr.f32.gmra.mrb[0].mxu0 %v117
    %v219 = vpop.f32.mrb[0].mxu0
    %v220 = vadd.f32 %v146, %v219
    %v221 = vpop.f32.mrb[0].mxu0
    %222 = vmatprep.mubr.f32.mxu0 0.0
    %223 = vmatmul.mubr.f32.gmra.mrb[0].mxu0 %v118
    %v224 = vpop.f32.mrb[0].mxu0
    %v225 = vadd.f32 %v146, %v224
    %v226 = vpop.f32.mrb[0].mxu0
    %227 = vmatprep.mubr.f32.mxu0 0.0
    %228 = vmatmul.mubr.f32.gmra.mrb[0].mxu0 %v119
    %v229 = vpop.f32.mrb[0].mxu0
    %v230 = vadd.f32 %v146, %v229
    %v231 = vpop.f32.mrb[0].mxu0
    %232 = vmatprep.mubr.f32.mxu0 0.0
    %233 = vmatmul.mubr.f32.gmra.mrb[0].mxu0 %v120
    %v234 = vpop.f32.mrb[0].mxu0
    %v235 = vadd.f32 %v146, %v234
    %v236 = vpop.f32.mrb[0].mxu0
    %237 = vmatprep.mubr.f32.mxu0 0.0
    %238 = vmatmul.mubr.f32.gmra.mrb[0].mxu0 %v121
    %v239 = vpop.f32.mrb[0].mxu0
    %v240 = vadd.f32 %v146, %v239
    %v241 = vpop.f32.mrb[0].mxu0
    %242 = vmatprep.mubr.f32.mxu0 0.0
    %243 = vmatmul.mubr.f32.gmra.mrb[0].mxu0 %v122
    %v244 = vpop.f32.mrb[0].mxu0
    %v245 = vadd.f32 %v146, %v244
    %v246 = vpop.f32.mrb[0].mxu0
    %247 = vmatprep.mubr.f32.mxu0 0.0
    %248 = vmatmul.mubr.f32.gmra.mrb[0].mxu0 %v123
    %v249 = vpop.f32.mrb[0].mxu0
    %v250 = vadd.f32 %v146, %v249
    %v251 = vpop.f32.mrb[0].mxu0
    %252 = vmatprep.mubr.f32.mxu0 0.0
    %253 = vmatmul.mubr.f32.gmra.mrb[0].mxu0 %v124
    %v254 = vpop.f32.mrb[0].mxu0
    %v255 = vadd.f32 %v146, %v254
    %v256 = vpop.f32.mrb[0].mxu0
    %257 = vdwg.mxu0
    %258 = vst [vmem:[#allocation2] sm:$0xff] %v215
    %259 = vst [vmem:[#allocation2 + $0x8] sm:$0xff] %v220
    %260 = vst [vmem:[#allocation2 + $0x10] sm:$0xff] %v225
    %261 = vst [vmem:[#allocation2 + $0x18] sm:$0xff] %v230
    %262 = vst [vmem:[#allocation2 + $0x20] sm:$0xff] %v235
    %263 = vst [vmem:[#allocation2 + $0x28] sm:$0xff] %v240
    %264 = vst [vmem:[#allocation2 + $0x30] sm:$0xff] %v245
    %265 = vst [vmem:[#allocation2 + $0x38] sm:$0xff] %v250
    %266 = vst [vmem:[#allocation2 + $0x40] sm:$0xff] %v255
    %vm267 = vcmp.ge.s32.totalorder %v61, 64
    %vm268 = vcmp.lt.s32.totalorder %v61, 96
    %vm269 = vmand %vm267, %vm268
    %v270 = vld [vmem:[#allocation4] sm:$0xff]
    %v271 = vld [vmem:[#allocation4 + $0x8] sm:$0xff]
    %v272 = vld [vmem:[#allocation4 + $0x10] sm:$0xff]
    %v273 = vld [vmem:[#allocation4 + $0x18] sm:$0xff]
    %v274 = vld [vmem:[#allocation2] sm:$0xff]
    %vm275 = vcmask 261120
    %v277 = vsel %vm275, 0.0, 0
    %279 = vmatprep.subr.mxu0 0.0
    %280 = vmatpush1.msra.mxu0 %v270
    %281 = vmatprep.subr.mxu0 0.0
    %282 = vmatpush1.msra.mxu0 %v271
    %283 = vmatprep.subr.mxu0 0.0
    %284 = vmatpush1.msra.mxu0 %v272
    %285 = vmatprep.subr.mxu0 0.0
    %286 = vmatpush1.msra.mxu0 %v273
    %287 = vmatprep.subr.mxu0 0.0
    %288 = vmatpush1.msra.mxu0 0.0
    %289 = vmatprep.subr.mxu0 0.0
    %290 = vmatpush1.msra.mxu0 0.0
    %291 = vmatprep.subr.mxu0 0.0
    %292 = vmatpush1.msra.mxu0 0.0
    %293 = vmatprep.subr.mxu0 0.0
    %294 = vmatpush1.msra.mxu0 0.0
    %295 = vmatprep.subr.mxu0 0.0
    %296 = vmatpush1.msra.mxu0 0.0
    %297 = vmatprep.subr.mxu0 0.0
    %298 = vmatpush1.msra.mxu0 0.0
    %299 = vmatprep.subr.mxu0 0.0
    %300 = vmatpush1.msra.mxu0 0.0
    %301 = vmatprep.subr.mxu0 0.0
    %302 = vmatpush1.msra.mxu0 0.0
    %303 = vmatprep.subr.mxu0 0.0
    %304 = vmatpush1.msra.mxu0 0.0
    %305 = vmatprep.subr.mxu0 0.0
    %306 = vmatpush1.msra.mxu0 0.0
    %307 = vmatprep.subr.mxu0 0.0
    %308 = vmatpush1.msra.mxu0 0.0
    %309 = vmatprep.subr.mxu0 0.0
    %310 = vmatpush1.msra.mxu0 0.0
    %311 = vmatprep.subr.mxu0 0.0
    %312 = vmatpush1.msra.mxu0 0.0
    %313 = vmatprep.subr.mxu0 0.0
    %314 = vmatpush1.msra.mxu0 0.0
    %315 = vmatprep.subr.mxu0 0.0
    %316 = vmatpush1.msra.mxu0 0.0
    %317 = vmatprep.subr.mxu0 0.0
    %318 = vmatpush1.msra.mxu0 0.0
    %319 = vmatprep.subr.mxu0 0.0
    %320 = vmatpush1.msra.mxu0 0.0
    %321 = vmatprep.subr.mxu0 0.0
    %322 = vmatpush1.msra.mxu0 0.0
    %323 = vmatprep.subr.mxu0 0.0
    %324 = vmatpush1.msra.mxu0 0.0
    %325 = vmatprep.subr.mxu0 0.0
    %326 = vmatpush1.msra.mxu0 0.0
    %327 = vmatprep.subr.mxu0 0.0
    %328 = vmatpush1.msra.mxu0 0.0
    %329 = vmatprep.subr.mxu0 0.0
    %330 = vmatpush1.msra.mxu0 0.0
    %331 = vmatprep.subr.mxu0 0.0
    %332 = vmatpush1.msra.mxu0 0.0
    %333 = vmatprep.subr.mxu0 0.0
    %334 = vmatpush1.msra.mxu0 0.0
    %335 = vmatprep.subr.mxu0 0.0
    %336 = vmatpush1.msra.mxu0 0.0
    %337 = vmatprep.subr.mxu0 0.0
    %338 = vmatpush1.msra.mxu0 0.0
    %339 = vmatprep.subr.mxu0 0.0
    %340 = vmatpush1.msra.mxu0 0.0
    %341 = vmatprep.subr.mxu0 0.0
    %342 = vmatpush1.msra.mxu0 0.0
    %343 = vmatprep.mubr.f32.mxu0 0.0
    %344 = vmatmul.mubr.f32.gmra.mrb[0].mxu0 %v277
    %v345 = vpop.f32.mrb[0].mxu0
    %v346 = vadd.f32 0.0, %v345
    %v347 = vpop.f32.mrb[0].mxu0
    %348 = vdwg.mxu0
    %v349 = vadd.f32 %v274, %v346
    %v350 = vxor.u32 %v349, 2147483648
    %v351 = vmul.f32 %v350, 1.442695
    %v352 = vpow.pop %v351
    %v353 = vadd.f32 %v352, 1.0
    %v354 = vrcp.pop %v353
    %v355 = vmul.f32 1.0, %v354
    %v356 = vmul.f32 %v355, 2.0
    %v357 = vsub.f32 %v356, 1.0
    %v358 = vsel %vm269, %v357, %v355
    %v359 = vmul.f32 %v358, 0.0
    %361 = vrot.lane.b32.xlu0 %v358, 64
    %v362 = vpop.permute.xlu0 %361
    %v364 = vmul.f32 %v358, %v362
    %366 = vrot.lane.b32.xlu0 %v364, 32
    %v367 = vpop.permute.xlu0 %366
    %v369 = vadd.f32 %v359, %v367
    %v370 = vtanh.pop %v369
    %372 = vrot.lane.b32.xlu0 %v370, 64
    %v373 = vpop.permute.xlu0 %372
    %v375 = vmul.f32 %v358, %v373
    %377 = vrot.lane.b32.xlu0 %v375, 32
    %v378 = vpop.permute.xlu0 %377
    %380 = vst.msk [vmem:[#allocation3] sm:$0xff] %vm275, %v378
    %v381 = vld [vmem:[#allocation2 + $0x8] sm:$0xff]
    %v382 = vsel %vm275, %v378, 0
    %384 = vmatprep.subr.mxu0 0.0
    %385 = vmatpush1.msra.mxu0 %v270
    %386 = vmatprep.subr.mxu0 0.0
    %387 = vmatpush1.msra.mxu0 %v271
    %388 = vmatprep.subr.mxu0 0.0
    %389 = vmatpush1.msra.mxu0 %v272
    %390 = vmatprep.subr.mxu0 0.0
    %391 = vmatpush1.msra.mxu0 %v273
    %392 = vmatprep.subr.mxu0 0.0
    %393 = vmatpush1.msra.mxu0 0.0
    %394 = vmatprep.subr.mxu0 0.0
    %395 = vmatpush1.msra.mxu0 0.0
    %396 = vmatprep.subr.mxu0 0.0
    %397 = vmatpush1.msra.mxu0 0.0
    %398 = vmatprep.subr.mxu0 0.0
    %399 = vmatpush1.msra.mxu0 0.0
    %400 = vmatprep.subr.mxu0 0.0
    %401 = vmatpush1.msra.mxu0 0.0
    %402 = vmatprep.subr.mxu0 0.0
    %403 = vmatpush1.msra.mxu0 0.0
    %404 = vmatprep.subr.mxu0 0.0
    %405 = vmatpush1.msra.mxu0 0.0
    %406 = vmatprep.subr.mxu0 0.0
    %407 = vmatpush1.msra.mxu0 0.0
    %408 = vmatprep.subr.mxu0 0.0
    %409 = vmatpush1.msra.mxu0 0.0
    %410 = vmatprep.subr.mxu0 0.0
    %411 = vmatpush1.msra.mxu0 0.0
    %412 = vmatprep.subr.mxu0 0.0
    %413 = vmatpush1.msra.mxu0 0.0
    %414 = vmatprep.subr.mxu0 0.0
    %415 = vmatpush1.msra.mxu0 0.0
    %416 = vmatprep.subr.mxu0 0.0
    %417 = vmatpush1.msra.mxu0 0.0
    %418 = vmatprep.subr.mxu0 0.0
    %419 = vmatpush1.msra.mxu0 0.0
    %420 = vmatprep.subr.mxu0 0.0
    %421 = vmatpush1.msra.mxu0 0.0
    %422 = vmatprep.subr.mxu0 0.0
    %423 = vmatpush1.msra.mxu0 0.0
    %424 = vmatprep.subr.mxu0 0.0
    %425 = vmatpush1.msra.mxu0 0.0
    %426 = vmatprep.subr.mxu0 0.0
    %427 = vmatpush1.msra.mxu0 0.0
    %428 = vmatprep.subr.mxu0 0.0
    %429 = vmatpush1.msra.mxu0 0.0
    %430 = vmatprep.subr.mxu0 0.0
    %431 = vmatpush1.msra.mxu0 0.0
    %432 = vmatprep.subr.mxu0 0.0
    %433 = vmatpush1.msra.mxu0 0.0
    %434 = vmatprep.subr.mxu0 0.0
    %435 = vmatpush1.msra.mxu0 0.0
    %436 = vmatprep.subr.mxu0 0.0
    %437 = vmatpush1.msra.mxu0 0.0
    %438 = vmatprep.subr.mxu0 0.0
    %439 = vmatpush1.msra.mxu0 0.0
    %440 = vmatprep.subr.mxu0 0.0
    %441 = vmatpush1.msra.mxu0 0.0
    %442 = vmatprep.subr.mxu0 0.0
    %443 = vmatpush1.msra.mxu0 0.0
    %444 = vmatprep.subr.mxu0 0.0
    %445 = vmatpush1.msra.mxu0 0.0
    %446 = vmatprep.subr.mxu0 0.0
    %447 = vmatpush1.msra.mxu0 0.0
    %448 = vmatprep.mubr.f32.mxu0 0.0
    %449 = vmatmul.mubr.f32.gmra.mrb[0].mxu0 %v382
    %v450 = vpop.f32.mrb[0].mxu0
    %v451 = vadd.f32 0.0, %v450
    %v452 = vpop.f32.mrb[0].mxu0
    %453 = vdwg.mxu0
    %v454 = vadd.f32 %v381, %v451
    %v455 = vxor.u32 %v454, 2147483648
    %v456 = vmul.f32 %v455, 1.442695
    %v457 = vpow.pop %v456
    %v458 = vadd.f32 %v457, 1.0
    %v459 = vrcp.pop %v458
    %v460 = vmul.f32 1.0, %v459
    %v461 = vmul.f32 %v460, 2.0
    %v462 = vsub.f32 %v461, 1.0
    %v463 = vsel %vm269, %v462, %v460
    %v464 = vmul.f32 %v463, %v369
    %466 = vrot.lane.b32.xlu0 %v463, 64
    %v467 = vpop.permute.xlu0 %466
    %v469 = vmul.f32 %v463, %v467
    %471 = vrot.lane.b32.xlu0 %v469, 32
    %v472 = vpop.permute.xlu0 %471
    %v474 = vadd.f32 %v464, %v472
    %v475 = vtanh.pop %v474
    %477 = vrot.lane.b32.xlu0 %v475, 64
    %v478 = vpop.permute.xlu0 %477
    %v480 = vmul.f32 %v463, %v478
    %482 = vrot.lane.b32.xlu0 %v480, 32
    %v483 = vpop.permute.xlu0 %482
    %485 = vst.msk [vmem:[#allocation3 + $0x8] sm:$0xff] %vm275, %v483
    %v486 = vld [vmem:[#allocation2 + $0x10] sm:$0xff]
    %v487 = vsel %vm275, %v483, 0
    %489 = vmatprep.subr.mxu0 0.0
    %490 = vmatpush1.msra.mxu0 %v270
    %491 = vmatprep.subr.mxu0 0.0
    %492 = vmatpush1.msra.mxu0 %v271
    %493 = vmatprep.subr.mxu0 0.0
    %494 = vmatpush1.msra.mxu0 %v272
    %495 = vmatprep.subr.mxu0 0.0
    %496 = vmatpush1.msra.mxu0 %v273
    %497 = vmatprep.subr.mxu0 0.0
    %498 = vmatpush1.msra.mxu0 0.0
    %499 = vmatprep.subr.mxu0 0.0
    %500 = vmatpush1.msra.mxu0 0.0
    %501 = vmatprep.subr.mxu0 0.0
    %502 = vmatpush1.msra.mxu0 0.0
    %503 = vmatprep.subr.mxu0 0.0
    %504 = vmatpush1.msra.mxu0 0.0
    %505 = vmatprep.subr.mxu0 0.0
    %506 = vmatpush1.msra.mxu0 0.0
    %507 = vmatprep.subr.mxu0 0.0
    %508 = vmatpush1.msra.mxu0 0.0
    %509 = vmatprep.subr.mxu0 0.0
    %510 = vmatpush1.msra.mxu0 0.0
    %511 = vmatprep.subr.mxu0 0.0
    %512 = vmatpush1.msra.mxu0 0.0
    %513 = vmatprep.subr.mxu0 0.0
    %514 = vmatpush1.msra.mxu0 0.0
    %515 = vmatprep.subr.mxu0 0.0
    %516 = vmatpush1.msra.mxu0 0.0
    %517 = vmatprep.subr.mxu0 0.0
    %518 = vmatpush1.msra.mxu0 0.0
    %519 = vmatprep.subr.mxu0 0.0
    %520 = vmatpush1.msra.mxu0 0.0
    %521 = vmatprep.subr.mxu0 0.0
    %522 = vmatpush1.msra.mxu0 0.0
    %523 = vmatprep.subr.mxu0 0.0
    %524 = vmatpush1.msra.mxu0 0.0
    %525 = vmatprep.subr.mxu0 0.0
    %526 = vmatpush1.msra.mxu0 0.0
    %527 = vmatprep.subr.mxu0 0.0
    %528 = vmatpush1.msra.mxu0 0.0
    %529 = vmatprep.subr.mxu0 0.0
    %530 = vmatpush1.msra.mxu0 0.0
    %531 = vmatprep.subr.mxu0 0.0
    %532 = vmatpush1.msra.mxu0 0.0
    %533 = vmatprep.subr.mxu0 0.0
    %534 = vmatpush1.msra.mxu0 0.0
    %535 = vmatprep.subr.mxu0 0.0
    %536 = vmatpush1.msra.mxu0 0.0
    %537 = vmatprep.subr.mxu0 0.0
    %538 = vmatpush1.msra.mxu0 0.0
    %539 = vmatprep.subr.mxu0 0.0
    %540 = vmatpush1.msra.mxu0 0.0
    %541 = vmatprep.subr.mxu0 0.0
    %542 = vmatpush1.msra.mxu0 0.0
    %543 = vmatprep.subr.mxu0 0.0
    %544 = vmatpush1.msra.mxu0 0.0
    %545 = vmatprep.subr.mxu0 0.0
    %546 = vmatpush1.msra.mxu0 0.0
    %547 = vmatprep.subr.mxu0 0.0
    %548 = vmatpush1.msra.mxu0 0.0
    %549 = vmatprep.subr.mxu0 0.0
    %550 = vmatpush1.msra.mxu0 0.0
    %551 = vmatprep.subr.mxu0 0.0
    %552 = vmatpush1.msra.mxu0 0.0
    %553 = vmatprep.mubr.f32.mxu0 0.0
    %554 = vmatmul.mubr.f32.gmra.mrb[0].mxu0 %v487
    %v555 = vpop.f32.mrb[0].mxu0
    %v556 = vadd.f32 0.0, %v555
    %v557 = vpop.f32.mrb[0].mxu0
    %558 = vdwg.mxu0
    %v559 = vadd.f32 %v486, %v556
    %v560 = vxor.u32 %v559, 2147483648
    %v561 = vmul.f32 %v560, 1.442695
    %v562 = vpow.pop %v561
    %v563 = vadd.f32 %v562, 1.0
    %v564 = vrcp.pop %v563
    %v565 = vmul.f32 1.0, %v564
    %v566 = vmul.f32 %v565, 2.0
    %v567 = vsub.f32 %v566, 1.0
    %v568 = vsel %vm269, %v567, %v565
    %v569 = vmul.f32 %v568, %v474
    %571 = vrot.lane.b32.xlu0 %v568, 64
    %v572 = vpop.permute.xlu0 %571
    %v574 = vmul.f32 %v568, %v572
    %576 = vrot.lane.b32.xlu0 %v574, 32
    %v577 = vpop.permute.xlu0 %576
    %v579 = vadd.f32 %v569, %v577
    %v580 = vtanh.pop %v579
    %582 = vrot.lane.b32.xlu0 %v580, 64
    %v583 = vpop.permute.xlu0 %582
    %v585 = vmul.f32 %v568, %v583
    %587 = vrot.lane.b32.xlu0 %v585, 32
    %v588 = vpop.permute.xlu0 %587
    %590 = vst.msk [vmem:[#allocation3 + $0x10] sm:$0xff] %vm275, %v588
    %v591 = vld [vmem:[#allocation2 + $0x18] sm:$0xff]
    %v592 = vsel %vm275, %v588, 0
    %594 = vmatprep.subr.mxu0 0.0
    %595 = vmatpush1.msra.mxu0 %v270
    %596 = vmatprep.subr.mxu0 0.0
    %597 = vmatpush1.msra.mxu0 %v271
    %598 = vmatprep.subr.mxu0 0.0
    %599 = vmatpush1.msra.mxu0 %v272
    %600 = vmatprep.subr.mxu0 0.0
    %601 = vmatpush1.msra.mxu0 %v273
    %602 = vmatprep.subr.mxu0 0.0
    %603 = vmatpush1.msra.mxu0 0.0
    %604 = vmatprep.subr.mxu0 0.0
    %605 = vmatpush1.msra.mxu0 0.0
    %606 = vmatprep.subr.mxu0 0.0
    %607 = vmatpush1.msra.mxu0 0.0
    %608 = vmatprep.subr.mxu0 0.0
    %609 = vmatpush1.msra.mxu0 0.0
    %610 = vmatprep.subr.mxu0 0.0
    %611 = vmatpush1.msra.mxu0 0.0
    %612 = vmatprep.subr.mxu0 0.0
    %613 = vmatpush1.msra.mxu0 0.0
    %614 = vmatprep.subr.mxu0 0.0
    %615 = vmatpush1.msra.mxu0 0.0
    %616 = vmatprep.subr.mxu0 0.0
    %617 = vmatpush1.msra.mxu0 0.0
    %618 = vmatprep.subr.mxu0 0.0
    %619 = vmatpush1.msra.mxu0 0.0
    %620 = vmatprep.subr.mxu0 0.0
    %621 = vmatpush1.msra.mxu0 0.0
    %622 = vmatprep.subr.mxu0 0.0
    %623 = vmatpush1.msra.mxu0 0.0
    %624 = vmatprep.subr.mxu0 0.0
    %625 = vmatpush1.msra.mxu0 0.0
    %626 = vmatprep.subr.mxu0 0.0
    %627 = vmatpush1.msra.mxu0 0.0
    %628 = vmatprep.subr.mxu0 0.0
    %629 = vmatpush1.msra.mxu0 0.0
    %630 = vmatprep.subr.mxu0 0.0
    %631 = vmatpush1.msra.mxu0 0.0
    %632 = vmatprep.subr.mxu0 0.0
    %633 = vmatpush1.msra.mxu0 0.0
    %634 = vmatprep.subr.mxu0 0.0
    %635 = vmatpush1.msra.mxu0 0.0
    %636 = vmatprep.subr.mxu0 0.0
    %637 = vmatpush1.msra.mxu0 0.0
    %638 = vmatprep.subr.mxu0 0.0
    %639 = vmatpush1.msra.mxu0 0.0
    %640 = vmatprep.subr.mxu0 0.0
    %641 = vmatpush1.msra.mxu0 0.0
    %642 = vmatprep.subr.mxu0 0.0
    %643 = vmatpush1.msra.mxu0 0.0
    %644 = vmatprep.subr.mxu0 0.0
    %645 = vmatpush1.msra.mxu0 0.0
    %646 = vmatprep.subr.mxu0 0.0
    %647 = vmatpush1.msra.mxu0 0.0
    %648 = vmatprep.subr.mxu0 0.0
    %649 = vmatpush1.msra.mxu0 0.0
    %650 = vmatprep.subr.mxu0 0.0
    %651 = vmatpush1.msra.mxu0 0.0
    %652 = vmatprep.subr.mxu0 0.0
    %653 = vmatpush1.msra.mxu0 0.0
    %654 = vmatprep.subr.mxu0 0.0
    %655 = vmatpush1.msra.mxu0 0.0
    %656 = vmatprep.subr.mxu0 0.0
    %657 = vmatpush1.msra.mxu0 0.0
    %658 = vmatprep.mubr.f32.mxu0 0.0
    %659 = vmatmul.mubr.f32.gmra.mrb[0].mxu0 %v592
    %v660 = vpop.f32.mrb[0].mxu0
    %v661 = vadd.f32 0.0, %v660
    %v662 = vpop.f32.mrb[0].mxu0
    %663 = vdwg.mxu0
    %v664 = vadd.f32 %v591, %v661
    %v665 = vxor.u32 %v664, 2147483648
    %v666 = vmul.f32 %v665, 1.442695
    %v667 = vpow.pop %v666
    %v668 = vadd.f32 %v667, 1.0
    %v669 = vrcp.pop %v668
    %v670 = vmul.f32 1.0, %v669
    %v671 = vmul.f32 %v670, 2.0
    %v672 = vsub.f32 %v671, 1.0
    %v673 = vsel %vm269, %v672, %v670
    %v674 = vmul.f32 %v673, %v579
    %676 = vrot.lane.b32.xlu0 %v673, 64
    %v677 = vpop.permute.xlu0 %676
    %v679 = vmul.f32 %v673, %v677
    %681 = vrot.lane.b32.xlu0 %v679, 32
    %v682 = vpop.permute.xlu0 %681
    %v684 = vadd.f32 %v674, %v682
    %v685 = vtanh.pop %v684
    %687 = vrot.lane.b32.xlu0 %v685, 64
    %v688 = vpop.permute.xlu0 %687
    %v690 = vmul.f32 %v673, %v688
    %692 = vrot.lane.b32.xlu0 %v690, 32
    %v693 = vpop.permute.xlu0 %692
    %695 = vst.msk [vmem:[#allocation3 + $0x18] sm:$0xff] %vm275, %v693
    %v696 = vld [vmem:[#allocation2 + $0x20] sm:$0xff]
    %v697 = vsel %vm275, %v693, 0
    %699 = vmatprep.subr.mxu0 0.0
    %700 = vmatpush1.msra.mxu0 %v270
    %701 = vmatprep.subr.mxu0 0.0
    %702 = vmatpush1.msra.mxu0 %v271
    %703 = vmatprep.subr.mxu0 0.0
    %704 = vmatpush1.msra.mxu0 %v272
    %705 = vmatprep.subr.mxu0 0.0
    %706 = vmatpush1.msra.mxu0 %v273
    %707 = vmatprep.subr.mxu0 0.0
    %708 = vmatpush1.msra.mxu0 0.0
    %709 = vmatprep.subr.mxu0 0.0
    %710 = vmatpush1.msra.mxu0 0.0
    %711 = vmatprep.subr.mxu0 0.0
    %712 = vmatpush1.msra.mxu0 0.0
    %713 = vmatprep.subr.mxu0 0.0
    %714 = vmatpush1.msra.mxu0 0.0
    %715 = vmatprep.subr.mxu0 0.0
    %716 = vmatpush1.msra.mxu0 0.0
    %717 = vmatprep.subr.mxu0 0.0
    %718 = vmatpush1.msra.mxu0 0.0
    %719 = vmatprep.subr.mxu0 0.0
    %720 = vmatpush1.msra.mxu0 0.0
    %721 = vmatprep.subr.mxu0 0.0
    %722 = vmatpush1.msra.mxu0 0.0
    %723 = vmatprep.subr.mxu0 0.0
    %724 = vmatpush1.msra.mxu0 0.0
    %725 = vmatprep.subr.mxu0 0.0
    %726 = vmatpush1.msra.mxu0 0.0
    %727 = vmatprep.subr.mxu0 0.0
    %728 = vmatpush1.msra.mxu0 0.0
    %729 = vmatprep.subr.mxu0 0.0
    %730 = vmatpush1.msra.mxu0 0.0
    %731 = vmatprep.subr.mxu0 0.0
    %732 = vmatpush1.msra.mxu0 0.0
    %733 = vmatprep.subr.mxu0 0.0
    %734 = vmatpush1.msra.mxu0 0.0
    %735 = vmatprep.subr.mxu0 0.0
    %736 = vmatpush1.msra.mxu0 0.0
    %737 = vmatprep.subr.mxu0 0.0
    %738 = vmatpush1.msra.mxu0 0.0
    %739 = vmatprep.subr.mxu0 0.0
    %740 = vmatpush1.msra.mxu0 0.0
    %741 = vmatprep.subr.mxu0 0.0
    %742 = vmatpush1.msra.mxu0 0.0
    %743 = vmatprep.subr.mxu0 0.0
    %744 = vmatpush1.msra.mxu0 0.0
    %745 = vmatprep.subr.mxu0 0.0
    %746 = vmatpush1.msra.mxu0 0.0
    %747 = vmatprep.subr.mxu0 0.0
    %748 = vmatpush1.msra.mxu0 0.0
    %749 = vmatprep.subr.mxu0 0.0
    %750 = vmatpush1.msra.mxu0 0.0
    %751 = vmatprep.subr.mxu0 0.0
    %752 = vmatpush1.msra.mxu0 0.0
    %753 = vmatprep.subr.mxu0 0.0
    %754 = vmatpush1.msra.mxu0 0.0
    %755 = vmatprep.subr.mxu0 0.0
    %756 = vmatpush1.msra.mxu0 0.0
    %757 = vmatprep.subr.mxu0 0.0
    %758 = vmatpush1.msra.mxu0 0.0
    %759 = vmatprep.subr.mxu0 0.0
    %760 = vmatpush1.msra.mxu0 0.0
    %761 = vmatprep.subr.mxu0 0.0
    %762 = vmatpush1.msra.mxu0 0.0
    %763 = vmatprep.mubr.f32.mxu0 0.0
    %764 = vmatmul.mubr.f32.gmra.mrb[0].mxu0 %v697
    %v765 = vpop.f32.mrb[0].mxu0
    %v766 = vadd.f32 0.0, %v765
    %v767 = vpop.f32.mrb[0].mxu0
    %768 = vdwg.mxu0
    %v769 = vadd.f32 %v696, %v766
    %v770 = vxor.u32 %v769, 2147483648
    %v771 = vmul.f32 %v770, 1.442695
    %v772 = vpow.pop %v771
    %v773 = vadd.f32 %v772, 1.0
    %v774 = vrcp.pop %v773
    %v775 = vmul.f32 1.0, %v774
    %v776 = vmul.f32 %v775, 2.0
    %v777 = vsub.f32 %v776, 1.0
    %v778 = vsel %vm269, %v777, %v775
    %v779 = vmul.f32 %v778, %v684
    %781 = vrot.lane.b32.xlu0 %v778, 64
    %v782 = vpop.permute.xlu0 %781
    %v784 = vmul.f32 %v778, %v782
    %786 = vrot.lane.b32.xlu0 %v784, 32
    %v787 = vpop.permute.xlu0 %786
    %v789 = vadd.f32 %v779, %v787
    %v790 = vtanh.pop %v789
    %792 = vrot.lane.b32.xlu0 %v790, 64
    %v793 = vpop.permute.xlu0 %792
    %v795 = vmul.f32 %v778, %v793
    %797 = vrot.lane.b32.xlu0 %v795, 32
    %v798 = vpop.permute.xlu0 %797
    %800 = vst.msk [vmem:[#allocation3 + $0x20] sm:$0xff] %vm275, %v798
    %v801 = vld [vmem:[#allocation2 + $0x28] sm:$0xff]
    %v802 = vsel %vm275, %v798, 0
    %804 = vmatprep.subr.mxu0 0.0
    %805 = vmatpush1.msra.mxu0 %v270
    %806 = vmatprep.subr.mxu0 0.0
    %807 = vmatpush1.msra.mxu0 %v271
    %808 = vmatprep.subr.mxu0 0.0
    %809 = vmatpush1.msra.mxu0 %v272
    %810 = vmatprep.subr.mxu0 0.0
    %811 = vmatpush1.msra.mxu0 %v273
    %812 = vmatprep.subr.mxu0 0.0
    %813 = vmatpush1.msra.mxu0 0.0
    %814 = vmatprep.subr.mxu0 0.0
    %815 = vmatpush1.msra.mxu0 0.0
    %816 = vmatprep.subr.mxu0 0.0
    %817 = vmatpush1.msra.mxu0 0.0
    %818 = vmatprep.subr.mxu0 0.0
    %819 = vmatpush1.msra.mxu0 0.0
    %820 = vmatprep.subr.mxu0 0.0
    %821 = vmatpush1.msra.mxu0 0.0
    %822 = vmatprep.subr.mxu0 0.0
    %823 = vmatpush1.msra.mxu0 0.0
    %824 = vmatprep.subr.mxu0 0.0
    %825 = vmatpush1.msra.mxu0 0.0
    %826 = vmatprep.subr.mxu0 0.0
    %827 = vmatpush1.msra.mxu0 0.0
    %828 = vmatprep.subr.mxu0 0.0
    %829 = vmatpush1.msra.mxu0 0.0
    %830 = vmatprep.subr.mxu0 0.0
    %831 = vmatpush1.msra.mxu0 0.0
    %832 = vmatprep.subr.mxu0 0.0
    %833 = vmatpush1.msra.mxu0 0.0
    %834 = vmatprep.subr.mxu0 0.0
    %835 = vmatpush1.msra.mxu0 0.0
    %836 = vmatprep.subr.mxu0 0.0
    %837 = vmatpush1.msra.mxu0 0.0
    %838 = vmatprep.subr.mxu0 0.0
    %839 = vmatpush1.msra.mxu0 0.0
    %840 = vmatprep.subr.mxu0 0.0
    %841 = vmatpush1.msra.mxu0 0.0
    %842 = vmatprep.subr.mxu0 0.0
    %843 = vmatpush1.msra.mxu0 0.0
    %844 = vmatprep.subr.mxu0 0.0
    %845 = vmatpush1.msra.mxu0 0.0
    %846 = vmatprep.subr.mxu0 0.0
    %847 = vmatpush1.msra.mxu0 0.0
    %848 = vmatprep.subr.mxu0 0.0
    %849 = vmatpush1.msra.mxu0 0.0
    %850 = vmatprep.subr.mxu0 0.0
    %851 = vmatpush1.msra.mxu0 0.0
    %852 = vmatprep.subr.mxu0 0.0
    %853 = vmatpush1.msra.mxu0 0.0
    %854 = vmatprep.subr.mxu0 0.0
    %855 = vmatpush1.msra.mxu0 0.0
    %856 = vmatprep.subr.mxu0 0.0
    %857 = vmatpush1.msra.mxu0 0.0
    %858 = vmatprep.subr.mxu0 0.0
    %859 = vmatpush1.msra.mxu0 0.0
    %860 = vmatprep.subr.mxu0 0.0
    %861 = vmatpush1.msra.mxu0 0.0
    %862 = vmatprep.subr.mxu0 0.0
    %863 = vmatpush1.msra.mxu0 0.0
    %864 = vmatprep.subr.mxu0 0.0
    %865 = vmatpush1.msra.mxu0 0.0
    %866 = vmatprep.subr.mxu0 0.0
    %867 = vmatpush1.msra.mxu0 0.0
    %868 = vmatprep.mubr.f32.mxu0 0.0
    %869 = vmatmul.mubr.f32.gmra.mrb[0].mxu0 %v802
    %v870 = vpop.f32.mrb[0].mxu0
    %v871 = vadd.f32 0.0, %v870
    %v872 = vpop.f32.mrb[0].mxu0
    %873 = vdwg.mxu0
    %v874 = vadd.f32 %v801, %v871
    %v875 = vxor.u32 %v874, 2147483648
    %v876 = vmul.f32 %v875, 1.442695
    %v877 = vpow.pop %v876
    %v878 = vadd.f32 %v877, 1.0
    %v879 = vrcp.pop %v878
    %v880 = vmul.f32 1.0, %v879
    %v881 = vmul.f32 %v880, 2.0
    %v882 = vsub.f32 %v881, 1.0
    %v883 = vsel %vm269, %v882, %v880
    %v884 = vmul.f32 %v883, %v789
    %886 = vrot.lane.b32.xlu0 %v883, 64
    %v887 = vpop.permute.xlu0 %886
    %v889 = vmul.f32 %v883, %v887
    %891 = vrot.lane.b32.xlu0 %v889, 32
    %v892 = vpop.permute.xlu0 %891
    %v894 = vadd.f32 %v884, %v892
    %v895 = vtanh.pop %v894
    %897 = vrot.lane.b32.xlu0 %v895, 64
    %v898 = vpop.permute.xlu0 %897
    %v900 = vmul.f32 %v883, %v898
    %902 = vrot.lane.b32.xlu0 %v900, 32
    %v903 = vpop.permute.xlu0 %902
    %905 = vst.msk [vmem:[#allocation3 + $0x28] sm:$0xff] %vm275, %v903
    %v906 = vld [vmem:[#allocation2 + $0x30] sm:$0xff]
    %v907 = vsel %vm275, %v903, 0
    %909 = vmatprep.subr.mxu0 0.0
    %910 = vmatpush1.msra.mxu0 %v270
    %911 = vmatprep.subr.mxu0 0.0
    %912 = vmatpush1.msra.mxu0 %v271
    %913 = vmatprep.subr.mxu0 0.0
    %914 = vmatpush1.msra.mxu0 %v272
    %915 = vmatprep.subr.mxu0 0.0
    %916 = vmatpush1.msra.mxu0 %v273
    %917 = vmatprep.subr.mxu0 0.0
    %918 = vmatpush1.msra.mxu0 0.0
    %919 = vmatprep.subr.mxu0 0.0
    %920 = vmatpush1.msra.mxu0 0.0
    %921 = vmatprep.subr.mxu0 0.0
    %922 = vmatpush1.msra.mxu0 0.0
    %923 = vmatprep.subr.mxu0 0.0
    %924 = vmatpush1.msra.mxu0 0.0
    %925 = vmatprep.subr.mxu0 0.0
    %926 = vmatpush1.msra.mxu0 0.0
    %927 = vmatprep.subr.mxu0 0.0
    %928 = vmatpush1.msra.mxu0 0.0
    %929 = vmatprep.subr.mxu0 0.0
    %930 = vmatpush1.msra.mxu0 0.0
    %931 = vmatprep.subr.mxu0 0.0
    %932 = vmatpush1.msra.mxu0 0.0
    %933 = vmatprep.subr.mxu0 0.0
    %934 = vmatpush1.msra.mxu0 0.0
    %935 = vmatprep.subr.mxu0 0.0
    %936 = vmatpush1.msra.mxu0 0.0
    %937 = vmatprep.subr.mxu0 0.0
    %938 = vmatpush1.msra.mxu0 0.0
    %939 = vmatprep.subr.mxu0 0.0
    %940 = vmatpush1.msra.mxu0 0.0
    %941 = vmatprep.subr.mxu0 0.0
    %942 = vmatpush1.msra.mxu0 0.0
    %943 = vmatprep.subr.mxu0 0.0
    %944 = vmatpush1.msra.mxu0 0.0
    %945 = vmatprep.subr.mxu0 0.0
    %946 = vmatpush1.msra.mxu0 0.0
    %947 = vmatprep.subr.mxu0 0.0
    %948 = vmatpush1.msra.mxu0 0.0
    %949 = vmatprep.subr.mxu0 0.0
    %950 = vmatpush1.msra.mxu0 0.0
    %951 = vmatprep.subr.mxu0 0.0
    %952 = vmatpush1.msra.mxu0 0.0
    %953 = vmatprep.subr.mxu0 0.0
    %954 = vmatpush1.msra.mxu0 0.0
    %955 = vmatprep.subr.mxu0 0.0
    %956 = vmatpush1.msra.mxu0 0.0
    %957 = vmatprep.subr.mxu0 0.0
    %958 = vmatpush1.msra.mxu0 0.0
    %959 = vmatprep.subr.mxu0 0.0
    %960 = vmatpush1.msra.mxu0 0.0
    %961 = vmatprep.subr.mxu0 0.0
    %962 = vmatpush1.msra.mxu0 0.0
    %963 = vmatprep.subr.mxu0 0.0
    %964 = vmatpush1.msra.mxu0 0.0
    %965 = vmatprep.subr.mxu0 0.0
    %966 = vmatpush1.msra.mxu0 0.0
    %967 = vmatprep.subr.mxu0 0.0
    %968 = vmatpush1.msra.mxu0 0.0
    %969 = vmatprep.subr.mxu0 0.0
    %970 = vmatpush1.msra.mxu0 0.0
    %971 = vmatprep.subr.mxu0 0.0
    %972 = vmatpush1.msra.mxu0 0.0
    %973 = vmatprep.mubr.f32.mxu0 0.0
    %974 = vmatmul.mubr.f32.gmra.mrb[0].mxu0 %v907
    %v975 = vpop.f32.mrb[0].mxu0
    %v976 = vadd.f32 0.0, %v975
    %v977 = vpop.f32.mrb[0].mxu0
    %978 = vdwg.mxu0
    %v979 = vadd.f32 %v906, %v976
    %v980 = vxor.u32 %v979, 2147483648
    %v981 = vmul.f32 %v980, 1.442695
    %v982 = vpow.pop %v981
    %v983 = vadd.f32 %v982, 1.0
    %v984 = vrcp.pop %v983
    %v985 = vmul.f32 1.0, %v984
    %v986 = vmul.f32 %v985, 2.0
    %v987 = vsub.f32 %v986, 1.0
    %v988 = vsel %vm269, %v987, %v985
    %v989 = vmul.f32 %v988, %v894
    %991 = vrot.lane.b32.xlu0 %v988, 64
    %v992 = vpop.permute.xlu0 %991
    %v994 = vmul.f32 %v988, %v992
    %996 = vrot.lane.b32.xlu0 %v994, 32
    %v997 = vpop.permute.xlu0 %996
    %v999 = vadd.f32 %v989, %v997
    %v1000 = vtanh.pop %v999
    %1002 = vrot.lane.b32.xlu0 %v1000, 64
    %v1003 = vpop.permute.xlu0 %1002
    %v1005 = vmul.f32 %v988, %v1003
    %1007 = vrot.lane.b32.xlu0 %v1005, 32
    %v1008 = vpop.permute.xlu0 %1007
    %1010 = vst.msk [vmem:[#allocation3 + $0x30] sm:$0xff] %vm275, %v1008
    %v1011 = vld [vmem:[#allocation2 + $0x38] sm:$0xff]
    %v1012 = vsel %vm275, %v1008, 0
    %1014 = vmatprep.subr.mxu0 0.0
    %1015 = vmatpush1.msra.mxu0 %v270
    %1016 = vmatprep.subr.mxu0 0.0
    %1017 = vmatpush1.msra.mxu0 %v271
    %1018 = vmatprep.subr.mxu0 0.0
    %1019 = vmatpush1.msra.mxu0 %v272
    %1020 = vmatprep.subr.mxu0 0.0
    %1021 = vmatpush1.msra.mxu0 %v273
    %1022 = vmatprep.subr.mxu0 0.0
    %1023 = vmatpush1.msra.mxu0 0.0
    %1024 = vmatprep.subr.mxu0 0.0
    %1025 = vmatpush1.msra.mxu0 0.0
    %1026 = vmatprep.subr.mxu0 0.0
    %1027 = vmatpush1.msra.mxu0 0.0
    %1028 = vmatprep.subr.mxu0 0.0
    %1029 = vmatpush1.msra.mxu0 0.0
    %1030 = vmatprep.subr.mxu0 0.0
    %1031 = vmatpush1.msra.mxu0 0.0
    %1032 = vmatprep.subr.mxu0 0.0
    %1033 = vmatpush1.msra.mxu0 0.0
    %1034 = vmatprep.subr.mxu0 0.0
    %1035 = vmatpush1.msra.mxu0 0.0
    %1036 = vmatprep.subr.mxu0 0.0
    %1037 = vmatpush1.msra.mxu0 0.0
    %1038 = vmatprep.subr.mxu0 0.0
    %1039 = vmatpush1.msra.mxu0 0.0
    %1040 = vmatprep.subr.mxu0 0.0
    %1041 = vmatpush1.msra.mxu0 0.0
    %1042 = vmatprep.subr.mxu0 0.0
    %1043 = vmatpush1.msra.mxu0 0.0
    %1044 = vmatprep.subr.mxu0 0.0
    %1045 = vmatpush1.msra.mxu0 0.0
    %1046 = vmatprep.subr.mxu0 0.0
    %1047 = vmatpush1.msra.mxu0 0.0
    %1048 = vmatprep.subr.mxu0 0.0
    %1049 = vmatpush1.msra.mxu0 0.0
    %1050 = vmatprep.subr.mxu0 0.0
    %1051 = vmatpush1.msra.mxu0 0.0
    %1052 = vmatprep.subr.mxu0 0.0
    %1053 = vmatpush1.msra.mxu0 0.0
    %1054 = vmatprep.subr.mxu0 0.0
    %1055 = vmatpush1.msra.mxu0 0.0
    %1056 = vmatprep.subr.mxu0 0.0
    %1057 = vmatpush1.msra.mxu0 0.0
    %1058 = vmatprep.subr.mxu0 0.0
    %1059 = vmatpush1.msra.mxu0 0.0
    %1060 = vmatprep.subr.mxu0 0.0
    %1061 = vmatpush1.msra.mxu0 0.0
    %1062 = vmatprep.subr.mxu0 0.0
    %1063 = vmatpush1.msra.mxu0 0.0
    %1064 = vmatprep.subr.mxu0 0.0
    %1065 = vmatpush1.msra.mxu0 0.0
    %1066 = vmatprep.subr.mxu0 0.0
    %1067 = vmatpush1.msra.mxu0 0.0
    %1068 = vmatprep.subr.mxu0 0.0
    %1069 = vmatpush1.msra.mxu0 0.0
    %1070 = vmatprep.subr.mxu0 0.0
    %1071 = vmatpush1.msra.mxu0 0.0
    %1072 = vmatprep.subr.mxu0 0.0
    %1073 = vmatpush1.msra.mxu0 0.0
    %1074 = vmatprep.subr.mxu0 0.0
    %1075 = vmatpush1.msra.mxu0 0.0
    %1076 = vmatprep.subr.mxu0 0.0
    %1077 = vmatpush1.msra.mxu0 0.0
    %1078 = vmatprep.mubr.f32.mxu0 0.0
    %1079 = vmatmul.mubr.f32.gmra.mrb[0].mxu0 %v1012
    %v1080 = vpop.f32.mrb[0].mxu0
    %v1081 = vadd.f32 0.0, %v1080
    %v1082 = vpop.f32.mrb[0].mxu0
    %1083 = vdwg.mxu0
    %v1084 = vadd.f32 %v1011, %v1081
    %v1085 = vxor.u32 %v1084, 2147483648
    %v1086 = vmul.f32 %v1085, 1.442695
    %v1087 = vpow.pop %v1086
    %v1088 = vadd.f32 %v1087, 1.0
    %v1089 = vrcp.pop %v1088
    %v1090 = vmul.f32 1.0, %v1089
    %v1091 = vmul.f32 %v1090, 2.0
    %v1092 = vsub.f32 %v1091, 1.0
    %v1093 = vsel %vm269, %v1092, %v1090
    %v1094 = vmul.f32 %v1093, %v999
    %1096 = vrot.lane.b32.xlu0 %v1093, 64
    %v1097 = vpop.permute.xlu0 %1096
    %v1099 = vmul.f32 %v1093, %v1097
    %1101 = vrot.lane.b32.xlu0 %v1099, 32
    %v1102 = vpop.permute.xlu0 %1101
    %v1104 = vadd.f32 %v1094, %v1102
    %v1105 = vtanh.pop %v1104
    %1107 = vrot.lane.b32.xlu0 %v1105, 64
    %v1108 = vpop.permute.xlu0 %1107
    %v1110 = vmul.f32 %v1093, %v1108
    %1112 = vrot.lane.b32.xlu0 %v1110, 32
    %v1113 = vpop.permute.xlu0 %1112
    %1115 = vst.msk [vmem:[#allocation3 + $0x38] sm:$0xff] %vm275, %v1113
    %v1116 = vld [vmem:[#allocation2 + $0x40] sm:$0xff]
    %v1117 = vsel %vm275, %v1113, 0
    %1119 = vmatprep.subr.mxu0 0.0
    %1120 = vmatpush1.msra.mxu0 %v270
    %1121 = vmatprep.subr.mxu0 0.0
    %1122 = vmatpush1.msra.mxu0 %v271
    %1123 = vmatprep.subr.mxu0 0.0
    %1124 = vmatpush1.msra.mxu0 %v272
    %1125 = vmatprep.subr.mxu0 0.0
    %1126 = vmatpush1.msra.mxu0 %v273
    %1127 = vmatprep.subr.mxu0 0.0
    %1128 = vmatpush1.msra.mxu0 0.0
    %1129 = vmatprep.subr.mxu0 0.0
    %1130 = vmatpush1.msra.mxu0 0.0
    %1131 = vmatprep.subr.mxu0 0.0
    %1132 = vmatpush1.msra.mxu0 0.0
    %1133 = vmatprep.subr.mxu0 0.0
    %1134 = vmatpush1.msra.mxu0 0.0
    %1135 = vmatprep.subr.mxu0 0.0
    %1136 = vmatpush1.msra.mxu0 0.0
    %1137 = vmatprep.subr.mxu0 0.0
    %1138 = vmatpush1.msra.mxu0 0.0
    %1139 = vmatprep.subr.mxu0 0.0
    %1140 = vmatpush1.msra.mxu0 0.0
    %1141 = vmatprep.subr.mxu0 0.0
    %1142 = vmatpush1.msra.mxu0 0.0
    %1143 = vmatprep.subr.mxu0 0.0
    %1144 = vmatpush1.msra.mxu0 0.0
    %1145 = vmatprep.subr.mxu0 0.0
    %1146 = vmatpush1.msra.mxu0 0.0
    %1147 = vmatprep.subr.mxu0 0.0
    %1148 = vmatpush1.msra.mxu0 0.0
    %1149 = vmatprep.subr.mxu0 0.0
    %1150 = vmatpush1.msra.mxu0 0.0
    %1151 = vmatprep.subr.mxu0 0.0
    %1152 = vmatpush1.msra.mxu0 0.0
    %1153 = vmatprep.subr.mxu0 0.0
    %1154 = vmatpush1.msra.mxu0 0.0
    %1155 = vmatprep.subr.mxu0 0.0
    %1156 = vmatpush1.msra.mxu0 0.0
    %1157 = vmatprep.subr.mxu0 0.0
    %1158 = vmatpush1.msra.mxu0 0.0
    %1159 = vmatprep.subr.mxu0 0.0
    %1160 = vmatpush1.msra.mxu0 0.0
    %1161 = vmatprep.subr.mxu0 0.0
    %1162 = vmatpush1.msra.mxu0 0.0
    %1163 = vmatprep.subr.mxu0 0.0
    %1164 = vmatpush1.msra.mxu0 0.0
    %1165 = vmatprep.subr.mxu0 0.0
    %1166 = vmatpush1.msra.mxu0 0.0
    %1167 = vmatprep.subr.mxu0 0.0
    %1168 = vmatpush1.msra.mxu0 0.0
    %1169 = vmatprep.subr.mxu0 0.0
    %1170 = vmatpush1.msra.mxu0 0.0
    %1171 = vmatprep.subr.mxu0 0.0
    %1172 = vmatpush1.msra.mxu0 0.0
    %1173 = vmatprep.subr.mxu0 0.0
    %1174 = vmatpush1.msra.mxu0 0.0
    %1175 = vmatprep.subr.mxu0 0.0
    %1176 = vmatpush1.msra.mxu0 0.0
    %1177 = vmatprep.subr.mxu0 0.0
    %1178 = vmatpush1.msra.mxu0 0.0
    %1179 = vmatprep.subr.mxu0 0.0
    %1180 = vmatpush1.msra.mxu0 0.0
    %1181 = vmatprep.subr.mxu0 0.0
    %1182 = vmatpush1.msra.mxu0 0.0
    %1183 = vmatprep.mubr.f32.mxu0 0.0
    %1184 = vmatmul.mubr.f32.gmra.mrb[0].mxu0 %v1117
    %v1185 = vpop.f32.mrb[0].mxu0
    %v1186 = vadd.f32 0.0, %v1185
    %v1187 = vpop.f32.mrb[0].mxu0
    %1188 = vdwg.mxu0
    %v1189 = vadd.f32 %v1116, %v1186
    %v1190 = vxor.u32 %v1189, 2147483648
    %v1191 = vmul.f32 %v1190, 1.442695
    %v1192 = vpow.pop %v1191
    %v1193 = vadd.f32 %v1192, 1.0
    %v1194 = vrcp.pop %v1193
    %v1195 = vmul.f32 1.0, %v1194
    %v1196 = vmul.f32 %v1195, 2.0
    %v1197 = vsub.f32 %v1196, 1.0
    %v1198 = vsel %vm269, %v1197, %v1195
    %v1199 = vmul.f32 %v1198, %v1104
    %1201 = vrot.lane.b32.xlu0 %v1198, 64
    %v1202 = vpop.permute.xlu0 %1201
    %v1204 = vmul.f32 %v1198, %v1202
    %1206 = vrot.lane.b32.xlu0 %v1204, 32
    %v1207 = vpop.permute.xlu0 %1206
    %v1209 = vadd.f32 %v1199, %v1207
    %v1210 = vtanh.pop %v1209
    %1212 = vrot.lane.b32.xlu0 %v1210, 64
    %v1213 = vpop.permute.xlu0 %1212
    %v1215 = vmul.f32 %v1198, %v1213
    %1217 = vrot.lane.b32.xlu0 %v1215, 32
    %v1218 = vpop.permute.xlu0 %1217
    %1220 = vst.msk [vmem:[#allocation3 + $0x40] sm:$0xff] %vm275, %v1218
    %v1221 = vld [vmem:[#allocation3] sm:$0xff]
    %v1222 = vld [vmem:[#allocation3 + $0x8] sm:$0xff]
    %v1223 = vld [vmem:[#allocation3 + $0x10] sm:$0xff]
    %v1224 = vld [vmem:[#allocation3 + $0x18] sm:$0xff]
    %v1225 = vld [vmem:[#allocation3 + $0x20] sm:$0xff]
    %v1226 = vld [vmem:[#allocation3 + $0x28] sm:$0xff]
    %v1227 = vld [vmem:[#allocation3 + $0x30] sm:$0xff]
    %v1228 = vld [vmem:[#allocation3 + $0x38] sm:$0xff]
    %v1229 = vld [vmem:[#allocation3 + $0x40] sm:$0xff]
    %v1230 = vld [vmem:[%s1] sm:$0xff]
    %v1231 = vld [vmem:[%s1 + $0x8] sm:$0xff]
    %v1232 = vld [vmem:[%s1 + $0x10] sm:$0xff]
    %v1233 = vld [vmem:[%s1 + $0x18] sm:$0xff]
    %v1234 = vld [vmem:[%s1 + $0x20] sm:$0xff]
    %v1235 = vld [vmem:[%s1 + $0x28] sm:$0xff]
    %v1236 = vld [vmem:[%s1 + $0x30] sm:$0xff]
    %v1237 = vld [vmem:[%s1 + $0x38] sm:$0xff]
    %v1238 = vld [vmem:[%s1 + $0x40] sm:$0xff]
    %1240 = vset.pattern.permute.xlu0 0
    %1241 = vperm.xlu0 %1240, %v1230
    %v1242 = vpop.permute.xlu0 %1241
    %1245 = vset.pattern.permute.xlu0 0
    %1246 = vperm.xlu0 %1245, %v1231
    %v1247 = vpop.permute.xlu0 %1246
    %1250 = vset.pattern.permute.xlu0 0
    %1251 = vperm.xlu0 %1250, %v1232
    %v1252 = vpop.permute.xlu0 %1251
    %1255 = vset.pattern.permute.xlu0 0
    %1256 = vperm.xlu0 %1255, %v1233
    %v1257 = vpop.permute.xlu0 %1256
    %1260 = vset.pattern.permute.xlu0 0
    %1261 = vperm.xlu0 %1260, %v1234
    %v1262 = vpop.permute.xlu0 %1261
    %1265 = vset.pattern.permute.xlu0 0
    %1266 = vperm.xlu0 %1265, %v1235
    %v1267 = vpop.permute.xlu0 %1266
    %1270 = vset.pattern.permute.xlu0 0
    %1271 = vperm.xlu0 %1270, %v1236
    %v1272 = vpop.permute.xlu0 %1271
    %1275 = vset.pattern.permute.xlu0 0
    %1276 = vperm.xlu0 %1275, %v1237
    %v1277 = vpop.permute.xlu0 %1276
    %1280 = vset.pattern.permute.xlu0 0
    %1281 = vperm.xlu0 %1280, %v1238
    %v1282 = vpop.permute.xlu0 %1281
    %v1284 = vmul.f32 %v1221, %v1242
    %v1285 = vmul.f32 %v1222, %v1247
    %v1286 = vmul.f32 %v1223, %v1252
    %v1287 = vmul.f32 %v1224, %v1257
    %v1288 = vmul.f32 %v1225, %v1262
    %v1289 = vmul.f32 %v1226, %v1267
    %v1290 = vmul.f32 %v1227, %v1272
    %v1291 = vmul.f32 %v1228, %v1277
    %v1292 = vmul.f32 %v1229, %v1282
    %v1293 = vld [vmem:[%s5] sm:$0xff]
    %v1294 = vld [vmem:[%s5 + $0x8] sm:$0xff]
    %v1295 = vld [vmem:[%s5 + $0x10] sm:$0xff]
    %v1296 = vld [vmem:[%s5 + $0x18] sm:$0xff]
    %v1297 = vld [vmem:[%s6] sm:$0x1]
    %v1299 = vlaneseq
    %v1300 = vshrl.u32 %v1299, 7
    %v1301 = vsub.s32 0, %v1300
    %v1302 = vrot.slane %v1297, %v1301
    %v1305 = vsel %vm275, %v1284, 0
    %v1308 = vsel %vm275, %v1285, 0
    %v1311 = vsel %vm275, %v1286, 0
    %v1314 = vsel %vm275, %v1287, 0
    %v1317 = vsel %vm275, %v1288, 0
    %v1320 = vsel %vm275, %v1289, 0
    %v1323 = vsel %vm275, %v1290, 0
    %v1326 = vsel %vm275, %v1291, 0
    %v1329 = vsel %vm275, %v1292, 0
    %1331 = vmatprep.subr.mxu0 0.0
    %1332 = vmatpush1.msra.mxu0 %v1293
    %1333 = vmatprep.subr.mxu0 0.0
    %1334 = vmatpush1.msra.mxu0 %v1294
    %1335 = vmatprep.subr.mxu0 0.0
    %1336 = vmatpush1.msra.mxu0 %v1295
    %1337 = vmatprep.subr.mxu0 0.0
    %1338 = vmatpush1.msra.mxu0 %v1296
    %1339 = vmatprep.subr.mxu0 0.0
    %1340 = vmatpush1.msra.mxu0 0.0
    %1341 = vmatprep.subr.mxu0 0.0
    %1342 = vmatpush1.msra.mxu0 0.0
    %1343 = vmatprep.subr.mxu0 0.0
    %1344 = vmatpush1.msra.mxu0 0.0
    %1345 = vmatprep.subr.mxu0 0.0
    %1346 = vmatpush1.msra.mxu0 0.0
    %1347 = vmatprep.subr.mxu0 0.0
    %1348 = vmatpush1.msra.mxu0 0.0
    %1349 = vmatprep.subr.mxu0 0.0
    %1350 = vmatpush1.msra.mxu0 0.0
    %1351 = vmatprep.subr.mxu0 0.0
    %1352 = vmatpush1.msra.mxu0 0.0
    %1353 = vmatprep.subr.mxu0 0.0
    %1354 = vmatpush1.msra.mxu0 0.0
    %1355 = vmatprep.subr.mxu0 0.0
    %1356 = vmatpush1.msra.mxu0 0.0
    %1357 = vmatprep.subr.mxu0 0.0
    %1358 = vmatpush1.msra.mxu0 0.0
    %1359 = vmatprep.subr.mxu0 0.0
    %1360 = vmatpush1.msra.mxu0 0.0
    %1361 = vmatprep.subr.mxu0 0.0
    %1362 = vmatpush1.msra.mxu0 0.0
    %1363 = vmatprep.subr.mxu0 0.0
    %1364 = vmatpush1.msra.mxu0 0.0
    %1365 = vmatprep.subr.mxu0 0.0
    %1366 = vmatpush1.msra.mxu0 0.0
    %1367 = vmatprep.subr.mxu0 0.0
    %1368 = vmatpush1.msra.mxu0 0.0
    %1369 = vmatprep.subr.mxu0 0.0
    %1370 = vmatpush1.msra.mxu0 0.0
    %1371 = vmatprep.subr.mxu0 0.0
    %1372 = vmatpush1.msra.mxu0 0.0
    %1373 = vmatprep.subr.mxu0 0.0
    %1374 = vmatpush1.msra.mxu0 0.0
    %1375 = vmatprep.subr.mxu0 0.0
    %1376 = vmatpush1.msra.mxu0 0.0
    %1377 = vmatprep.subr.mxu0 0.0
    %1378 = vmatpush1.msra.mxu0 0.0
    %1379 = vmatprep.subr.mxu0 0.0
    %1380 = vmatpush1.msra.mxu0 0.0
    %1381 = vmatprep.subr.mxu0 0.0
    %1382 = vmatpush1.msra.mxu0 0.0
    %1383 = vmatprep.subr.mxu0 0.0
    %1384 = vmatpush1.msra.mxu0 0.0
    %1385 = vmatprep.subr.mxu0 0.0
    %1386 = vmatpush1.msra.mxu0 0.0
    %1387 = vmatprep.subr.mxu0 0.0
    %1388 = vmatpush1.msra.mxu0 0.0
    %1389 = vmatprep.subr.mxu0 0.0
    %1390 = vmatpush1.msra.mxu0 0.0
    %1391 = vmatprep.subr.mxu0 0.0
    %1392 = vmatpush1.msra.mxu0 0.0
    %1393 = vmatprep.subr.mxu0 0.0
    %1394 = vmatpush1.msra.mxu0 0.0
    %1395 = vmatprep.mubr.f32.mxu0 0.0
    %1396 = vmatmul.mubr.f32.gmra.mrb[0].mxu0 %v1305
    %v1397 = vpop.f32.mrb[0].mxu0
    %v1398 = vadd.f32 %v1302, %v1397
    %v1399 = vpop.f32.mrb[0].mxu0
    %1400 = vmatprep.mubr.f32.mxu0 0.0
    %1401 = vmatmul.mubr.f32.gmra.mrb[0].mxu0 %v1308
    %v1402 = vpop.f32.mrb[0].mxu0
    %v1403 = vadd.f32 %v1302, %v1402
    %v1404 = vpop.f32.mrb[0].mxu0
    %1405 = vmatprep.mubr.f32.mxu0 0.0
    %1406 = vmatmul.mubr.f32.gmra.mrb[0].mxu0 %v1311
    %v1407 = vpop.f32.mrb[0].mxu0
    %v1408 = vadd.f32 %v1302, %v1407
    %v1409 = vpop.f32.mrb[0].mxu0
    %1410 = vmatprep.mubr.f32.mxu0 0.0
    %1411 = vmatmul.mubr.f32.gmra.mrb[0].mxu0 %v1314
    %v1412 = vpop.f32.mrb[0].mxu0
    %v1413 = vadd.f32 %v1302, %v1412
    %v1414 = vpop.f32.mrb[0].mxu0
    %1415 = vmatprep.mubr.f32.mxu0 0.0
    %1416 = vmatmul.mubr.f32.gmra.mrb[0].mxu0 %v1317
    %v1417 = vpop.f32.mrb[0].mxu0
    %v1418 = vadd.f32 %v1302, %v1417
    %v1419 = vpop.f32.mrb[0].mxu0
    %1420 = vmatprep.mubr.f32.mxu0 0.0
    %1421 = vmatmul.mubr.f32.gmra.mrb[0].mxu0 %v1320
    %v1422 = vpop.f32.mrb[0].mxu0
    %v1423 = vadd.f32 %v1302, %v1422
    %v1424 = vpop.f32.mrb[0].mxu0
    %1425 = vmatprep.mubr.f32.mxu0 0.0
    %1426 = vmatmul.mubr.f32.gmra.mrb[0].mxu0 %v1323
    %v1427 = vpop.f32.mrb[0].mxu0
    %v1428 = vadd.f32 %v1302, %v1427
    %v1429 = vpop.f32.mrb[0].mxu0
    %1430 = vmatprep.mubr.f32.mxu0 0.0
    %1431 = vmatmul.mubr.f32.gmra.mrb[0].mxu0 %v1326
    %v1432 = vpop.f32.mrb[0].mxu0
    %v1433 = vadd.f32 %v1302, %v1432
    %v1434 = vpop.f32.mrb[0].mxu0
    %1435 = vmatprep.mubr.f32.mxu0 0.0
    %1436 = vmatmul.mubr.f32.gmra.mrb[0].mxu0 %v1329
    %v1437 = vpop.f32.mrb[0].mxu0
    %v1438 = vadd.f32 %v1302, %v1437
    %v1439 = vpop.f32.mrb[0].mxu0
    %1440 = vdwg.mxu0
    %v1441 = vld [vmem:[#allocation7] sm:$0xff]
    %v1442 = vld [vmem:[#allocation7 + $0x8] sm:$0xff]
    %v1443 = vld [vmem:[#allocation7 + $0x10] sm:$0xff]
    %v1444 = vld [vmem:[#allocation7 + $0x18] sm:$0xff]
    %v1445 = vld [vmem:[#allocation7 + $0x20] sm:$0xff]
    %v1446 = vld [vmem:[#allocation7 + $0x28] sm:$0xff]
    %v1447 = vld [vmem:[#allocation7 + $0x30] sm:$0xff]
    %v1448 = vld [vmem:[#allocation7 + $0x38] sm:$0xff]
    %v1449 = vld [vmem:[#allocation7 + $0x40] sm:$0xff]
    %v1450 = vadd.f32 %v1441, 1e-10
    %v1451 = vadd.f32 %v1442, 1e-10
    %v1452 = vadd.f32 %v1443, 1e-10
    %v1453 = vadd.f32 %v1444, 1e-10
    %v1454 = vadd.f32 %v1445, 1e-10
    %v1455 = vadd.f32 %v1446, 1e-10
    %v1456 = vadd.f32 %v1447, 1e-10
    %v1457 = vadd.f32 %v1448, 1e-10
    %v1458 = vadd.f32 %v1449, 1e-10
    %v1459 = vlog2.pop %v1450
    %v1460 = vmul.f32 %v1459, 0.6931472
    %v1461 = vlog2.pop %v1451
    %v1462 = vmul.f32 %v1461, 0.6931472
    %v1463 = vlog2.pop %v1452
    %v1464 = vmul.f32 %v1463, 0.6931472
    %v1465 = vlog2.pop %v1453
    %v1466 = vmul.f32 %v1465, 0.6931472
    %v1467 = vlog2.pop %v1454
    %v1468 = vmul.f32 %v1467, 0.6931472
    %v1469 = vlog2.pop %v1455
    %v1470 = vmul.f32 %v1469, 0.6931472
    %v1471 = vlog2.pop %v1456
    %v1472 = vmul.f32 %v1471, 0.6931472
    %v1473 = vlog2.pop %v1457
    %v1474 = vmul.f32 %v1473, 0.6931472
    %v1475 = vlog2.pop %v1458
    %v1476 = vmul.f32 %v1475, 0.6931472
    %v1477 = vsub.f32 0.0, %v1460
    %v1478 = vsub.f32 0.0, %v1462
    %v1479 = vsub.f32 0.0, %v1464
    %v1480 = vsub.f32 0.0, %v1466
    %v1481 = vsub.f32 0.0, %v1468
    %v1482 = vsub.f32 0.0, %v1470
    %v1483 = vsub.f32 0.0, %v1472
    %v1484 = vsub.f32 0.0, %v1474
    %v1485 = vsub.f32 0.0, %v1476
    %v1486 = vadd.f32 %v1477, 1e-10
    %v1487 = vadd.f32 %v1478, 1e-10
    %v1488 = vadd.f32 %v1479, 1e-10
    %v1489 = vadd.f32 %v1480, 1e-10
    %v1490 = vadd.f32 %v1481, 1e-10
    %v1491 = vadd.f32 %v1482, 1e-10
    %v1492 = vadd.f32 %v1483, 1e-10
    %v1493 = vadd.f32 %v1484, 1e-10
    %v1494 = vadd.f32 %v1485, 1e-10
    %v1495 = vlog2.pop %v1486
    %v1496 = vmul.f32 %v1495, 0.6931472
    %v1497 = vlog2.pop %v1487
    %v1498 = vmul.f32 %v1497, 0.6931472
    %v1499 = vlog2.pop %v1488
    %v1500 = vmul.f32 %v1499, 0.6931472
    %v1501 = vlog2.pop %v1489
    %v1502 = vmul.f32 %v1501, 0.6931472
    %v1503 = vlog2.pop %v1490
    %v1504 = vmul.f32 %v1503, 0.6931472
    %v1505 = vlog2.pop %v1491
    %v1506 = vmul.f32 %v1505, 0.6931472
    %v1507 = vlog2.pop %v1492
    %v1508 = vmul.f32 %v1507, 0.6931472
    %v1509 = vlog2.pop %v1493
    %v1510 = vmul.f32 %v1509, 0.6931472
    %v1511 = vlog2.pop %v1494
    %v1512 = vmul.f32 %v1511, 0.6931472
    %v1513 = vsub.f32 0.0, %v1496
    %v1514 = vsub.f32 0.0, %v1498
    %v1515 = vsub.f32 0.0, %v1500
    %v1516 = vsub.f32 0.0, %v1502
    %v1517 = vsub.f32 0.0, %v1504
    %v1518 = vsub.f32 0.0, %v1506
    %v1519 = vsub.f32 0.0, %v1508
    %v1520 = vsub.f32 0.0, %v1510
    %v1521 = vsub.f32 0.0, %v1512
    %v1522 = vadd.f32 %v1398, %v1513
    %v1523 = vadd.f32 %v1403, %v1514
    %v1524 = vadd.f32 %v1408, %v1515
    %v1525 = vadd.f32 %v1413, %v1516
    %v1526 = vadd.f32 %v1418, %v1517
    %v1527 = vadd.f32 %v1423, %v1518
    %v1528 = vadd.f32 %v1428, %v1519
    %v1529 = vadd.f32 %v1433, %v1520
    %v1530 = vadd.f32 %v1438, %v1521
    %1531 = vmax.xlane.f32.xlu0 %v1522
    %v1532 = vpop.xlane.xlu0 %1531
    %1533 = vmax.xlane.f32.xlu0 %v1523
    %v1534 = vpop.xlane.xlu0 %1533
    %1535 = vmax.xlane.f32.xlu0 %v1524
    %v1536 = vpop.xlane.xlu0 %1535
    %1537 = vmax.xlane.f32.xlu0 %v1525
    %v1538 = vpop.xlane.xlu0 %1537
    %1539 = vmax.xlane.f32.xlu0 %v1526
    %v1540 = vpop.xlane.xlu0 %1539
    %1541 = vmax.xlane.f32.xlu0 %v1527
    %v1542 = vpop.xlane.xlu0 %1541
    %1543 = vmax.xlane.f32.xlu0 %v1528
    %v1544 = vpop.xlane.xlu0 %1543
    %1545 = vmax.xlane.f32.xlu0 %v1529
    %v1546 = vpop.xlane.xlu0 %1545
    %1547 = vmax.xlane.f32.xlu0 %v1530
    %v1548 = vpop.xlane.xlu0 %1547
    %v1549 = vsub.f32 %v1522, %v1532
    %v1550 = vsub.f32 %v1523, %v1534
    %v1551 = vsub.f32 %v1524, %v1536
    %v1552 = vsub.f32 %v1525, %v1538
    %v1553 = vsub.f32 %v1526, %v1540
    %v1554 = vsub.f32 %v1527, %v1542
    %v1555 = vsub.f32 %v1528, %v1544
    %v1556 = vsub.f32 %v1529, %v1546
    %v1557 = vsub.f32 %v1530, %v1548
    %v1558 = vmul.f32 %v1549, 1.442695
    %v1559 = vpow.pop %v1558
    %v1560 = vmul.f32 %v1550, 1.442695
    %v1561 = vpow.pop %v1560
    %v1562 = vmul.f32 %v1551, 1.442695
    %v1563 = vpow.pop %v1562
    %v1564 = vmul.f32 %v1552, 1.442695
    %v1565 = vpow.pop %v1564
    %v1566 = vmul.f32 %v1553, 1.442695
    %v1567 = vpow.pop %v1566
    %v1568 = vmul.f32 %v1554, 1.442695
    %v1569 = vpow.pop %v1568
    %v1570 = vmul.f32 %v1555, 1.442695
    %v1571 = vpow.pop %v1570
    %v1572 = vmul.f32 %v1556, 1.442695
    %v1573 = vpow.pop %v1572
    %v1574 = vmul.f32 %v1557, 1.442695
    %v1575 = vpow.pop %v1574
    %1576 = vadd.xlane.f32.xlu0 %v1559
    %v1577 = vpop.xlane.xlu0 %1576
    %1578 = vadd.xlane.f32.xlu0 %v1561
    %v1579 = vpop.xlane.xlu0 %1578
    %1580 = vadd.xlane.f32.xlu0 %v1563
    %v1581 = vpop.xlane.xlu0 %1580
    %1582 = vadd.xlane.f32.xlu0 %v1565
    %v1583 = vpop.xlane.xlu0 %1582
    %1584 = vadd.xlane.f32.xlu0 %v1567
    %v1585 = vpop.xlane.xlu0 %1584
    %1586 = vadd.xlane.f32.xlu0 %v1569
    %v1587 = vpop.xlane.xlu0 %1586
    %1588 = vadd.xlane.f32.xlu0 %v1571
    %v1589 = vpop.xlane.xlu0 %1588
    %1590 = vadd.xlane.f32.xlu0 %v1573
    %v1591 = vpop.xlane.xlu0 %1590
    %1592 = vadd.xlane.f32.xlu0 %v1575
    %v1593 = vpop.xlane.xlu0 %1592
    %v1594 = vrcp.pop %v1577
    %v1595 = vrcp.pop %v1579
    %v1596 = vrcp.pop %v1581
    %v1597 = vrcp.pop %v1583
    %v1598 = vrcp.pop %v1585
    %v1599 = vrcp.pop %v1587
    %v1600 = vrcp.pop %v1589
    %v1601 = vrcp.pop %v1591
    %v1602 = vrcp.pop %v1593
    %v1603 = vmul.f32 %v1559, %v1594
    %v1604 = vmul.f32 %v1561, %v1595
    %v1605 = vmul.f32 %v1563, %v1596
    %v1606 = vmul.f32 %v1565, %v1597
    %v1607 = vmul.f32 %v1567, %v1598
    %v1608 = vmul.f32 %v1569, %v1599
    %v1609 = vmul.f32 %v1571, %v1600
    %v1610 = vmul.f32 %v1573, %v1601
    %v1611 = vmul.f32 %v1575, %v1602
    %1612 = vst [vmem:[#allocation9] sm:$0xff] %v1603
    %1613 = vst [vmem:[#allocation9 + $0x8] sm:$0xff] %v1604
    %1614 = vst [vmem:[#allocation9 + $0x10] sm:$0xff] %v1605
    %1615 = vst [vmem:[#allocation9 + $0x18] sm:$0xff] %v1606
    %1616 = vst [vmem:[#allocation9 + $0x20] sm:$0xff] %v1607
    %1617 = vst [vmem:[#allocation9 + $0x28] sm:$0xff] %v1608
    %1618 = vst [vmem:[#allocation9 + $0x30] sm:$0xff] %v1609
    %1619 = vst [vmem:[#allocation9 + $0x38] sm:$0xff] %v1610
    %1620 = vst [vmem:[#allocation9 + $0x40] sm:$0xff] %v1611
    %vm1621 = vcmp.ge.f32.partialorder %v1522, %v1532
    %vm1622 = vcmp.ge.f32.partialorder %v1523, %v1534
    %vm1623 = vcmp.ge.f32.partialorder %v1524, %v1536
    %vm1624 = vcmp.ge.f32.partialorder %v1525, %v1538
    %vm1625 = vcmp.ge.f32.partialorder %v1526, %v1540
    %vm1626 = vcmp.ge.f32.partialorder %v1527, %v1542
    %vm1627 = vcmp.ge.f32.partialorder %v1528, %v1544
    %vm1628 = vcmp.ge.f32.partialorder %v1529, %v1546
    %vm1629 = vcmp.ge.f32.partialorder %v1530, %v1548
    %v1630 = vsel %vm1621, %v61, 128
    %v1631 = vsel %vm1622, %v61, 128
    %v1632 = vsel %vm1623, %v61, 128
    %v1633 = vsel %vm1624, %v61, 128
    %v1634 = vsel %vm1625, %v61, 128
    %v1635 = vsel %vm1626, %v61, 128
    %v1636 = vsel %vm1627, %v61, 128
    %v1637 = vsel %vm1628, %v61, 128
    %v1638 = vsel %vm1629, %v61, 128
    %v1639 = vand.u32 %v1630, 65535
    %v1640 = vshra.s32 %v1630, 16
    %v1641 = vcvt.s32.f32 %v1639
    %v1642 = vcvt.s32.f32 %v1640
    %1643 = vmin.xlane.f32.xlu0 %v1642
    %v1644 = vpop.xlane.xlu0 %1643
    %vm1645 = vcmp.eq.f32.partialorder %v1642, %v1644
    %v1646 = vsel %vm1645, %v1641, inf
    %1647 = vmin.xlane.f32.xlu0 %v1646
    %v1648 = vpop.xlane.xlu0 %1647
    %v1649 = vcvt.f32.s32 %v1648
    %v1650 = vcvt.f32.s32 %v1644
    %v1651 = vshll.u32 %v1650, 16
    %v1652 = vadd.s32 %v1651, %v1649
    %v1653 = vand.u32 %v1631, 65535
    %v1654 = vshra.s32 %v1631, 16
    %v1655 = vcvt.s32.f32 %v1653
    %v1656 = vcvt.s32.f32 %v1654
    %1657 = vmin.xlane.f32.xlu0 %v1656
    %v1658 = vpop.xlane.xlu0 %1657
    %vm1659 = vcmp.eq.f32.partialorder %v1656, %v1658
    %v1660 = vsel %vm1659, %v1655, inf
    %1661 = vmin.xlane.f32.xlu0 %v1660
    %v1662 = vpop.xlane.xlu0 %1661
    %v1663 = vcvt.f32.s32 %v1662
    %v1664 = vcvt.f32.s32 %v1658
    %v1665 = vshll.u32 %v1664, 16
    %v1666 = vadd.s32 %v1665, %v1663
    %v1667 = vand.u32 %v1632, 65535
    %v1668 = vshra.s32 %v1632, 16
    %v1669 = vcvt.s32.f32 %v1667
    %v1670 = vcvt.s32.f32 %v1668
    %1671 = vmin.xlane.f32.xlu0 %v1670
    %v1672 = vpop.xlane.xlu0 %1671
    %vm1673 = vcmp.eq.f32.partialorder %v1670, %v1672
    %v1674 = vsel %vm1673, %v1669, inf
    %1675 = vmin.xlane.f32.xlu0 %v1674
    %v1676 = vpop.xlane.xlu0 %1675
    %v1677 = vcvt.f32.s32 %v1676
    %v1678 = vcvt.f32.s32 %v1672
    %v1679 = vshll.u32 %v1678, 16
    %v1680 = vadd.s32 %v1679, %v1677
    %v1681 = vand.u32 %v1633, 65535
    %v1682 = vshra.s32 %v1633, 16
    %v1683 = vcvt.s32.f32 %v1681
    %v1684 = vcvt.s32.f32 %v1682
    %1685 = vmin.xlane.f32.xlu0 %v1684
    %v1686 = vpop.xlane.xlu0 %1685
    %vm1687 = vcmp.eq.f32.partialorder %v1684, %v1686
    %v1688 = vsel %vm1687, %v1683, inf
    %1689 = vmin.xlane.f32.xlu0 %v1688
    %v1690 = vpop.xlane.xlu0 %1689
    %v1691 = vcvt.f32.s32 %v1690
    %v1692 = vcvt.f32.s32 %v1686
    %v1693 = vshll.u32 %v1692, 16
    %v1694 = vadd.s32 %v1693, %v1691
    %v1695 = vand.u32 %v1634, 65535
    %v1696 = vshra.s32 %v1634, 16
    %v1697 = vcvt.s32.f32 %v1695
    %v1698 = vcvt.s32.f32 %v1696
    %1699 = vmin.xlane.f32.xlu0 %v1698
    %v1700 = vpop.xlane.xlu0 %1699
    %vm1701 = vcmp.eq.f32.partialorder %v1698, %v1700
    %v1702 = vsel %vm1701, %v1697, inf
    %1703 = vmin.xlane.f32.xlu0 %v1702
    %v1704 = vpop.xlane.xlu0 %1703
    %v1705 = vcvt.f32.s32 %v1704
    %v1706 = vcvt.f32.s32 %v1700
    %v1707 = vshll.u32 %v1706, 16
    %v1708 = vadd.s32 %v1707, %v1705
    %v1709 = vand.u32 %v1635, 65535
    %v1710 = vshra.s32 %v1635, 16
    %v1711 = vcvt.s32.f32 %v1709
    %v1712 = vcvt.s32.f32 %v1710
    %1713 = vmin.xlane.f32.xlu0 %v1712
    %v1714 = vpop.xlane.xlu0 %1713
    %vm1715 = vcmp.eq.f32.partialorder %v1712, %v1714
    %v1716 = vsel %vm1715, %v1711, inf
    %1717 = vmin.xlane.f32.xlu0 %v1716
    %v1718 = vpop.xlane.xlu0 %1717
    %v1719 = vcvt.f32.s32 %v1718
    %v1720 = vcvt.f32.s32 %v1714
    %v1721 = vshll.u32 %v1720, 16
    %v1722 = vadd.s32 %v1721, %v1719
    %v1723 = vand.u32 %v1636, 65535
    %v1724 = vshra.s32 %v1636, 16
    %v1725 = vcvt.s32.f32 %v1723
    %v1726 = vcvt.s32.f32 %v1724
    %1727 = vmin.xlane.f32.xlu0 %v1726
    %v1728 = vpop.xlane.xlu0 %1727
    %vm1729 = vcmp.eq.f32.partialorder %v1726, %v1728
    %v1730 = vsel %vm1729, %v1725, inf
    %1731 = vmin.xlane.f32.xlu0 %v1730
    %v1732 = vpop.xlane.xlu0 %1731
    %v1733 = vcvt.f32.s32 %v1732
    %v1734 = vcvt.f32.s32 %v1728
    %v1735 = vshll.u32 %v1734, 16
    %v1736 = vadd.s32 %v1735, %v1733
    %v1737 = vand.u32 %v1637, 65535
    %v1738 = vshra.s32 %v1637, 16
    %v1739 = vcvt.s32.f32 %v1737
    %v1740 = vcvt.s32.f32 %v1738
    %1741 = vmin.xlane.f32.xlu0 %v1740
    %v1742 = vpop.xlane.xlu0 %1741
    %vm1743 = vcmp.eq.f32.partialorder %v1740, %v1742
    %v1744 = vsel %vm1743, %v1739, inf
    %1745 = vmin.xlane.f32.xlu0 %v1744
    %v1746 = vpop.xlane.xlu0 %1745
    %v1747 = vcvt.f32.s32 %v1746
    %v1748 = vcvt.f32.s32 %v1742
    %v1749 = vshll.u32 %v1748, 16
    %v1750 = vadd.s32 %v1749, %v1747
    %v1751 = vand.u32 %v1638, 65535
    %v1752 = vshra.s32 %v1638, 16
    %v1753 = vcvt.s32.f32 %v1751
    %v1754 = vcvt.s32.f32 %v1752
    %1755 = vmin.xlane.f32.xlu0 %v1754
    %v1756 = vpop.xlane.xlu0 %1755
    %vm1757 = vcmp.eq.f32.partialorder %v1754, %v1756
    %v1758 = vsel %vm1757, %v1753, inf
    %1759 = vmin.xlane.f32.xlu0 %v1758
    %v1760 = vpop.xlane.xlu0 %1759
    %v1761 = vcvt.f32.s32 %v1760
    %v1762 = vcvt.f32.s32 %v1756
    %v1763 = vshll.u32 %v1762, 16
    %v1764 = vadd.s32 %v1763, %v1761
    %vm1765 = vcmask 7168
    %1766 = vst.msk [vmem:[%s9] sm:$0xff] %vm1765, %v1652
    %1767 = vst.msk [vmem:[%s9 + $0x8] sm:$0xff] %vm1765, %v1666
    %1768 = vst.msk [vmem:[%s9 + $0x10] sm:$0xff] %vm1765, %v1680
    %1769 = vst.msk [vmem:[%s9 + $0x18] sm:$0xff] %vm1765, %v1694
    %1770 = vst.msk [vmem:[%s9 + $0x20] sm:$0xff] %vm1765, %v1708
    %1771 = vst.msk [vmem:[%s9 + $0x28] sm:$0xff] %vm1765, %v1722
    %1772 = vst.msk [vmem:[%s9 + $0x30] sm:$0xff] %vm1765, %v1736
    %1773 = vst.msk [vmem:[%s9 + $0x38] sm:$0xff] %vm1765, %v1750
    %1774 = vst.msk [vmem:[%s9 + $0x40] sm:$0xff] %vm1765, %v1764
    // Predicated region
    $region42: #{tpu_custom_call.1} parent=1 // pred_check
      _
    $region43: #{tpu_custom_call.1} parent=1 // pred_check_branch
      %1776 = sbr.rel (0) target = $region45
    $region44: #{tpu_custom_call.1} parent=1 // pred_region
      %s1778 = ssub.s32 1152, 1152
      %1779 = vsyncadd [#allocation6], %s1778
      %s1780 = sshll.u32 [#allocation9], 4
      %s1781 = int_to_ptr.vmem [resolvable:$true] %s1780
      %1786 = dma.vmem_to_hbm [thread:$0]  %s1781, 1152, %s8, [#allocation6], 128, 128, 8
    $region45: #{tpu_custom_call.1} parent=1 // pred_fallthru
      _
    // Predicated region
    $region46: #{tpu_custom_call.1} parent=1 // pred_check
      _
    $region47: #{tpu_custom_call.1} parent=1 // pred_check_branch
      %1788 = sbr.rel (0) target = $region49
    $region48: #{tpu_custom_call.1} parent=1 // pred_region
      _
    $region49: #{tpu_custom_call.1} parent=1 // pred_fallthru
      _
    // Predicated region
    $region50: #{tpu_custom_call.1} parent=1 // pred_check
      _
    $region51: #{tpu_custom_call.1} parent=1 // pred_check_branch
      %1790 = sbr.rel (0) target = $region53
    $region52: #{tpu_custom_call.1} parent=1 // pred_region
      %1791 = dma.done [#allocation6], 1152
    $region53: #{tpu_custom_call.1} parent=1 // pred_fallthru
      _
    // Predicated region
    $region54: #{tpu_custom_call.1} parent=1 // pred_check
      _
    $region55: #{tpu_custom_call.1} parent=1 // pred_check_branch
      %1793 = sbr.rel (0) target = $region57
    $region56: #{tpu_custom_call.1} parent=1 // pred_region
      _
    $region57: #{tpu_custom_call.1} parent=1 // pred_fallthru
      _
    %1794 = vsyncpa [#allocation5], 1
    %1795 = vsyncpa [#allocation8], 1
    %1796 = vsyncpa [#allocation6], 1

</llo_original>
